<compile_context>
chip_gen: v6e
topology: v6e:2x2x1
jax: 0.10.0
libtpu: 0.0.40
codegen_flags: <defaults>
</compile_context>

<pallas_src>
import functools

import jax
import jax.numpy as jnp
from jax.experimental import pallas as pl
from jax.experimental.pallas import tpu as pltpu


# ----------------------------- kernel body ------------------------------


def _mish(z):
    # mish(z) = z * tanh(softplus(z)), computed stably with a single exp:
    #   z >  0 : t = (1 + 2 e^{-z}) / (1 + 2 e^{-z} + 2 e^{-2z})
    #   z <= 0 : t = (e^{2z} + 2 e^{z}) / (e^{2z} + 2 e^{z} + 2)
    ez = jnp.exp(-jnp.abs(z))                       # in (0, 1], never overflows
    n = jnp.where(z > 0, 1.0 + 2.0 * ez, ez * ez + 2.0 * ez)
    d = jnp.where(z > 0, n + 2.0 * ez * ez, n + 2.0)
    return z * n / d


def _fused_gnn_kernel(x_ref, a_ref, w_pre_ref, b_pre_ref, w_cat_ref, b_sum_ref,
                      w_post_ref, b_post_ref, o_ref, h_scr, zg_scr, zs_scr,
                      *, num_layers, hp, tm, mish_dtype):
    l = pl.program_id(0)          # layer axis (sequential, "arbitrary")
    i = pl.program_id(1)          # node-row-tile axis (streams A_hat row blocks)

    # Layer entry (first row tile): refresh the whole-graph transform for this layer.
    @pl.when(i == 0)
    def _layer_entry():
        @pl.when(l == 0)
        def _preprocess():
            # h = mish(x @ W_pre + b_pre)   (bf16 MXU inputs, f32 accumulate)
            h0 = jnp.dot(x_ref[...], w_pre_ref[...],
                         preferred_element_type=jnp.float32) + b_pre_ref[...]
            h_scr[...] = _mish(h0.astype(mish_dtype)).astype(jnp.bfloat16)

        # One fat matmul for both the GCN transform and the skip linear.
        z = jnp.dot(h_scr[...], w_cat_ref[0],
                    preferred_element_type=jnp.float32)             # (Np, 2Hp) f32
        zg_scr[...] = z[:, :hp].astype(jnp.bfloat16)                # GCN half
        zs_scr[...] = z[:, hp:] + b_sum_ref[0]                      # skip half + biases

    # Aggregation for this A_hat row block, then the mish epilogue.
    rows = pl.ds(pl.multiple_of(i * tm, tm), tm)
    agg = jnp.dot(a_ref[...], zg_scr[...], preferred_element_type=jnp.float32)
    h_new = _mish((agg + zs_scr[rows, :]).astype(mish_dtype)).astype(jnp.bfloat16)
    h_scr[rows, :] = h_new

    # Last layer: fused postprocess linear for this row tile (no activation).
    @pl.when(l == num_layers - 1)
    def _postprocess():
        out = jnp.dot(h_new, w_post_ref[...], preferred_element_type=jnp.float32)
        o_ref[...] = (out + b_post_ref[...]).astype(o_ref.dtype)


# ----------------------------- wrapper / glue -----------------------------


def _round_up(v, m):
    return ((v + m - 1) // m) * m


def _pad2(x, rows, cols):
    r, c = x.shape
    return jnp.pad(x, ((0, rows - r), (0, cols - c)))


def _row_tile(np_):
    # Largest 128-multiple tile (<=512) dividing the padded node count; big tiles
    # amortize the ~0.35us per-grid-step overhead when streaming A_hat from HBM.
    for t in (512, 256, 128):
        if np_ % t == 0:
            return t
    return np_


def _mish_compute_dtype():
    # bf16 VPU/EUP paths exist on v6e/v7x; keep the epilogue in f32 on <=v5.
    try:
        kind = jax.devices()[0].device_kind.lower()
    except Exception:
        return jnp.float32
    if any(v in kind for v in ("v2", "v3", "v4", "v5")):
        return jnp.float32
    return jnp.bfloat16


def normalized_adjacency_padded(edge_index, num_nodes, padded_nodes):
    """A_hat = D^{-1/2} (A + I) D^{-1/2}, message flow src -> dst (PyG GCNConv norm).

    Built directly at the padded size and cast to bf16 once; padded rows/cols come out
    exactly zero (deg = 0 -> dinv = 0), so padding never leaks into real rows."""
    src, dst = edge_index[0], edge_index[1]
    a = jnp.zeros((padded_nodes, padded_nodes), jnp.float32)
    a = a.at[dst, src].add(1.0)                     # A[i, j] = #edges j -> i
    self_loop = (jnp.arange(padded_nodes) < num_nodes).astype(jnp.float32)
    a = a + jnp.diag(self_loop)
    deg = a.sum(axis=1)
    dinv = jnp.where(deg > 0, jax.lax.rsqrt(deg), 0.0)
    return (dinv[:, None] * a * dinv[None, :]).astype(jnp.bfloat16)


def gnn_forward(params, x, edge_index):
    n, f = x.shape
    hdim = params["pre_w"].shape[0]
    odim = params["post_w"].shape[0]
    num_layers = len(params["layers"])

    # pad every dim to lane-dense 128 multiples (sublane 8 implied by 128)
    np_ = _round_up(max(n, 8), 128)
    fp = _round_up(f, 128)
    hp = _round_up(hdim, 128)
    op = _round_up(odim, 128)
    tm = _row_tile(np_)
    n_tiles = np_ // tm

    a_p = normalized_adjacency_padded(edge_index, n, np_)              # bf16 (Np, Np)
    x_p = _pad2(x, np_, fp).astype(jnp.bfloat16)

    # pre-transpose weights to (in, out), zero-pad, cast to bf16; biases stay f32
    w_pre = _pad2(params["pre_w"].T, fp, hp).astype(jnp.bfloat16)
    b_pre = _pad2(params["pre_b"].reshape(1, -1), 1, hp)

    w_cat = jnp.stack([
        jnp.concatenate([_pad2(wg.T, hp, hp), _pad2(ws.T, hp, hp)], axis=1)
        for (wg, bg, ws, bs) in params["layers"]
    ]).astype(jnp.bfloat16)                                            # (L, Hp, 2Hp)
    b_sum = jnp.stack([
        _pad2((bg + bs).reshape(1, -1), 1, hp)
        for (wg, bg, ws, bs) in params["layers"]
    ])                                                                 # (L, 1, Hp)

    w_post = _pad2(params["post_w"].T, hp, op).astype(jnp.bfloat16)
    b_post = _pad2(params["post_b"].reshape(1, -1), 1, op)

    # --- VMEM budget: scoped default (16/32 MiB) was the capacity wall; size explicitly.
    resident = (x_p.size * 2 + w_pre.size * 2 + b_pre.size * 4
                + 2 * (hp * 2 * hp * 2 + hp * 4)        # current-layer Wcat/bias (2 bufs)
                + w_post.size * 2 + b_post.size * 4
                + 2 * tm * np_ * 2                      # A row-block double buffer
                + 2 * tm * op * 4)                      # output block double buffer
    scratch = np_ * hp * (2 + 2 + 4)                    # h (bf16), zg (bf16), zs (f32)
    live = np_ * 2 * hp * 4 + np_ * hp * 4 + tm * hp * 4    # z, h0, agg temporaries
    vmem_limit = int(min(max((resident + scratch + live) * 3 // 2, 16 * 2**20),
                         64 * 2**20))                   # stay within v7x physical VMEM

    flops = (2 * np_ * fp * hp
             + num_layers * (2 * np_ * hp * (2 * hp) + 2 * np_ * np_ * hp)
             + 2 * np_ * hp * op)
    cost = pl.CostEstimate(
        flops=int(flops),
        transcendentals=int(np_ * hp * (num_layers + 1)),
        bytes_accessed=int(num_layers * np_ * np_ * 2 + x_p.size * 2
                           + w_cat.size * 2 + w_pre.size * 2 + w_post.size * 2
                           + b_sum.size * 4 + np_ * op * 4))

    const = lambda l, i: (0, 0)
    per_layer = lambda l, i: (l, 0, 0)

    out_p = pl.pallas_call(
        functools.partial(_fused_gnn_kernel, num_layers=num_layers, hp=hp, tm=tm,
                          mish_dtype=_mish_compute_dtype()),
        out_shape=jax.ShapeDtypeStruct((np_, op), jnp.float32),
        grid=(num_layers, n_tiles),
        in_specs=[
            pl.BlockSpec((np_, fp), const),                  # x: resident in VMEM
            pl.BlockSpec((tm, np_), lambda l, i: (i, 0)),    # A_hat: streamed row blocks
            pl.BlockSpec((fp, hp), const),                   # W_pre
            pl.BlockSpec((1, hp), const),                    # b_pre
            pl.BlockSpec((1, hp, 2 * hp), per_layer),        # [Wg|Ws] of current layer
            pl.BlockSpec((1, 1, hp), per_layer),             # (bg + bs) of current layer
            pl.BlockSpec((hp, op), const),                   # W_post
            pl.BlockSpec((1, op), const),                    # b_post
        ],
        out_specs=pl.BlockSpec((tm, op), lambda l, i: (i, 0)),
        scratch_shapes=[
            pltpu.VMEM((np_, hp), jnp.bfloat16),   # h   (layer input, bf16 for the MXU)
            pltpu.VMEM((np_, hp), jnp.bfloat16),   # zg = h @ Wg     (aggregation RHS)
            pltpu.VMEM((np_, hp), jnp.float32),    # zs = h @ Ws + (bg + bs)
        ],
        compiler_params=pltpu.CompilerParams(
            # Row tiles depend on the previous layer's full h via per-core scratch, so
            # the row axis must stay "arbitrary" (see TODO about v7x core_map split).
            dimension_semantics=("arbitrary", "arbitrary"),
            vmem_limit_bytes=vmem_limit),
        cost_estimate=cost,
    )(x_p, a_p, w_pre, b_pre, w_cat, b_sum, w_post, b_post)

    return out_p[:n, :odim]


# ----------------------------- params -----------------------------


def init_params(key, num_node_features, hidden_channels, out_channels, num_layers):
    def lin_init(k, fan_in, fan_out):
        kw, kb = jax.random.split(k)
        bound = 1.0 / jnp.sqrt(float(fan_in))
        w = jax.random.uniform(kw, (fan_out, fan_in), jnp.float32, -bound, bound)
        b = jax.random.uniform(kb, (fan_out,), jnp.float32, -bound, bound)
        return w, b

    keys = jax.random.split(key, 2 + 2 * num_layers)
    params = {}
    params["pre_w"], params["pre_b"] = lin_init(keys[0], num_node_features, hidden_channels)
    params["layers"] = []
    for i in range(num_layers):
        wg, bg = lin_init(keys[1 + 2 * i], hidden_channels, hidden_channels)
        ws, bs = lin_init(keys[2 + 2 * i], hidden_channels, hidden_channels)
        params["layers"].append((wg, bg, ws, bs))
    params["post_w"], params["post_b"] = lin_init(keys[-1], hidden_channels, out_channels)
    return params


# ----------------------------- main -----------------------------

if __name__ == "__main__":
    NUM_NODES = 16
    NUM_EDGES = 40
    NUM_NODE_FEATURES = 8
    HIDDEN_CHANNELS = 32
    OUT_CHANNELS = 4
    NUM_LAYERS = 3

    key = jax.random.PRNGKey(0)
    k_x, k_e, k_p = jax.random.split(key, 3)

    x = jax.random.normal(k_x, (NUM_NODES, NUM_NODE_FEATURES), jnp.float32)
    edge_index = jax.random.randint(k_e, (2, NUM_EDGES), 0, NUM_NODES, jnp.int32)

    params = init_params(k_p, NUM_NODE_FEATURES, HIDDEN_CHANNELS, OUT_CHANNELS, NUM_LAYERS)

    out = jax.jit(gnn_forward)(params, x, edge_index)
    out = jax.block_until_ready(out)
    assert out.shape == (NUM_NODES, OUT_CHANNELS)
    assert bool(jnp.all(jnp.isfinite(out)))
    print("KERNEL_OK")
</pallas_src>

<mosaic_0001>
module attributes {stable_mosaic.version = 11 : i64} {
  func.func private @main(%arg0: i32) attributes {dimension_semantics = [#tpu.dimension_semantics<core_parallel>], iteration_bounds = array<i64: 2>, tpu.core_type = #tpu.core_type<sc_scalar_subcore>, window_params = []} {
    return
  }
}

module attributes {stable_mosaic.version = 11 : i64} {
  func.func private @main(%arg0: i32) attributes {dimension_semantics = [#tpu.dimension_semantics<core_parallel>], iteration_bounds = array<i64: 2>, tpu.core_type = #tpu.core_type<sc_scalar_subcore>, window_params = []} {
    return
  }
}

module attributes {stable_mosaic.version = 11 : i64} {
  func.func @_fused_gnn_kernel(%arg0: i32, %arg1: i32, %arg2: memref<128x128xbf16, #tpu.memory_space<vmem>>, %arg3: memref<128x128xbf16, #tpu.memory_space<vmem>>, %arg4: memref<128x128xbf16, #tpu.memory_space<vmem>>, %arg5: memref<1x128xf32, #tpu.memory_space<vmem>>, %arg6: memref<1x128x256xbf16, #tpu.memory_space<vmem>>, %arg7: memref<1x1x128xf32, #tpu.memory_space<vmem>>, %arg8: memref<128x128xbf16, #tpu.memory_space<vmem>>, %arg9: memref<1x128xf32, #tpu.memory_space<vmem>>, %arg10: memref<128x128xf32, #tpu.memory_space<vmem>>, %arg11: memref<128x128xbf16, #tpu.memory_space<vmem>>, %arg12: memref<128x128xbf16, #tpu.memory_space<vmem>>, %arg13: memref<128x128xf32, #tpu.memory_space<vmem>>) attributes {dimension_semantics = [#tpu.dimension_semantics<arbitrary>, #tpu.dimension_semantics<arbitrary>], iteration_bounds = array<i64: 3, 1>, scalar_prefetch = 0 : i64, scratch_operands = 3 : i64, tpu.core_type = #tpu.core_type<tc>, window_params = [{pipeline_mode = #tpu.pipeline_mode<synchronous>, transform_indices = @transform_0, window_bounds = array<i64: 128, 128>}, {transform_indices = @transform_1, window_bounds = array<i64: 128, 128>}, {pipeline_mode = #tpu.pipeline_mode<synchronous>, transform_indices = @transform_2, window_bounds = array<i64: 128, 128>}, {pipeline_mode = #tpu.pipeline_mode<synchronous>, transform_indices = @transform_3, window_bounds = array<i64: 1, 128>}, {transform_indices = @transform_4, window_bounds = array<i64: 1, 128, 256>}, {transform_indices = @transform_5, window_bounds = array<i64: 1, 1, 128>}, {pipeline_mode = #tpu.pipeline_mode<synchronous>, transform_indices = @transform_6, window_bounds = array<i64: 128, 128>}, {pipeline_mode = #tpu.pipeline_mode<synchronous>, transform_indices = @transform_7, window_bounds = array<i64: 1, 128>}, {transform_indices = @transform_8, window_bounds = array<i64: 128, 128>}]} {
    %c0_i32 = arith.constant 0 : i32
    %0 = arith.cmpi eq, %arg1, %c0_i32 : i32
    %1 = arith.extui %0 : i1 to i32
    %c0_i32_0 = arith.constant 0 : i32
    %2 = arith.cmpi ne, %1, %c0_i32_0 : i32
    scf.if %2 {
      %c0_i32_15 = arith.constant 0 : i32
      %43 = arith.cmpi eq, %arg0, %c0_i32_15 : i32
      %44 = arith.extui %43 : i1 to i32
      %c0_i32_16 = arith.constant 0 : i32
      %45 = arith.cmpi ne, %44, %c0_i32_16 : i32
      scf.if %45 {
        %c0_30 = arith.constant 0 : index
        %c0_31 = arith.constant 0 : index
        %59 = vector.load %arg2[%c0_30, %c0_31] : memref<128x128xbf16, #tpu.memory_space<vmem>>, vector<128x128xbf16>
        %c0_32 = arith.constant 0 : index
        %c0_33 = arith.constant 0 : index
        %60 = vector.load %arg4[%c0_32, %c0_33] : memref<128x128xbf16, #tpu.memory_space<vmem>>, vector<128x128xbf16>
        %cst_34 = arith.constant dense<0.000000e+00> : vector<128x128xf32>
        %61 = tpu.matmul %59, %60, %cst_34 {dimension_numbers = #tpu.dot_dimension_numbers<[1], [0], [0], [1], [0, 0, 1, 1], [], []>} : vector<128x128xbf16>, vector<128x128xbf16>, vector<128x128xf32> -> vector<128x128xf32>
        %c0_35 = arith.constant 0 : index
        %c0_36 = arith.constant 0 : index
        %62 = vector.load %arg5[%c0_35, %c0_36] : memref<1x128xf32, #tpu.memory_space<vmem>>, vector<1x128xf32>
        %63 = vector.broadcast %62 : vector<1x128xf32> to vector<128x128xf32>
        %64 = arith.addf %61, %63 : vector<128x128xf32>
        %65 = arith.truncf %64 : vector<128x128xf32> to vector<128x128xbf16>
        %66 = math.absf %65 : vector<128x128xbf16>
        %cst_37 = arith.constant 0.000000e+00 : bf16
        %67 = vector.broadcast %cst_37 : bf16 to vector<128x128xbf16>
        %68 = arith.subf %67, %66 : vector<128x128xbf16>
        %69 = math.exp %68 : vector<128x128xbf16>
        %cst_38 = arith.constant 0.000000e+00 : bf16
        %70 = vector.broadcast %cst_38 : bf16 to vector<128x128xbf16>
        %71 = arith.cmpf ogt, %65, %70 : vector<128x128xbf16>
        %cst_39 = arith.constant 2.000000e+00 : bf16
        %72 = vector.broadcast %cst_39 : bf16 to vector<128x128xbf16>
        %73 = arith.mulf %72, %69 : vector<128x128xbf16>
        %cst_40 = arith.constant 1.000000e+00 : bf16
        %74 = vector.broadcast %cst_40 : bf16 to vector<128x128xbf16>
        %75 = arith.addf %74, %73 : vector<128x128xbf16>
        %76 = arith.mulf %69, %69 : vector<128x128xbf16>
        %cst_41 = arith.constant 2.000000e+00 : bf16
        %77 = vector.broadcast %cst_41 : bf16 to vector<128x128xbf16>
        %78 = arith.mulf %77, %69 : vector<128x128xbf16>
        %79 = arith.addf %76, %78 : vector<128x128xbf16>
        %80 = arith.select %71, %75, %79 : vector<128x128xi1>, vector<128x128xbf16>
        %cst_42 = arith.constant 0.000000e+00 : bf16
        %81 = vector.broadcast %cst_42 : bf16 to vector<128x128xbf16>
        %82 = arith.cmpf ogt, %65, %81 : vector<128x128xbf16>
        %cst_43 = arith.constant 2.000000e+00 : bf16
        %83 = vector.broadcast %cst_43 : bf16 to vector<128x128xbf16>
        %84 = arith.mulf %83, %69 : vector<128x128xbf16>
        %85 = arith.mulf %84, %69 : vector<128x128xbf16>
        %86 = arith.addf %80, %85 : vector<128x128xbf16>
        %cst_44 = arith.constant 2.000000e+00 : bf16
        %87 = vector.broadcast %cst_44 : bf16 to vector<128x128xbf16>
        %88 = arith.addf %80, %87 : vector<128x128xbf16>
        %89 = arith.select %82, %86, %88 : vector<128x128xi1>, vector<128x128xbf16>
        %90 = arith.mulf %65, %80 : vector<128x128xbf16>
        %91 = arith.divf %90, %89 : vector<128x128xbf16>
        %c0_45 = arith.constant 0 : index
        %c0_46 = arith.constant 0 : index
        %92 = vector.load %arg11[%c0_45, %c0_46] : memref<128x128xbf16, #tpu.memory_space<vmem>>, vector<128x128xbf16>
        tpu.vector_store %arg11[%c0_45, %c0_46], %91 {strides = array<i32>} : memref<128x128xbf16, #tpu.memory_space<vmem>>, vector<128x128xbf16>,
      } else {
      }
      %c0_17 = arith.constant 0 : index
      %c0_18 = arith.constant 0 : index
      %46 = vector.load %arg11[%c0_17, %c0_18] : memref<128x128xbf16, #tpu.memory_space<vmem>>, vector<128x128xbf16>
      %c0_19 = arith.constant 0 : index
      %c0_20 = arith.constant 0 : index
      %c0_21 = arith.constant 0 : index
      %47 = vector.load %arg6[%c0_19, %c0_20, %c0_21] : memref<1x128x256xbf16, #tpu.memory_space<vmem>>, vector<1x128x256xbf16>
      %48 = vector.shape_cast %47 : vector<1x128x256xbf16> to vector<128x256xbf16>
      %cst_22 = arith.constant dense<0.000000e+00> : vector<128x256xf32>
      %49 = tpu.matmul %46, %48, %cst_22 {dimension_numbers = #tpu.dot_dimension_numbers<[1], [0], [0], [1], [0, 0, 1, 1], [], []>} : vector<128x128xbf16>, vector<128x256xbf16>, vector<128x256xf32> -> vector<128x256xf32>
      %50 = vector.extract_strided_slice %49 {offsets = [0, 0], sizes = [128, 128], strides = [1, 1]} : vector<128x256xf32> to vector<128x128xf32>
      %51 = arith.truncf %50 : vector<128x128xf32> to vector<128x128xbf16>
      %c0_23 = arith.constant 0 : index
      %c0_24 = arith.constant 0 : index
      %52 = vector.load %arg12[%c0_23, %c0_24] : memref<128x128xbf16, #tpu.memory_space<vmem>>, vector<128x128xbf16>
      tpu.vector_store %arg12[%c0_23, %c0_24], %51 {strides = array<i32>} : memref<128x128xbf16, #tpu.memory_space<vmem>>, vector<128x128xbf16>,
      %53 = vector.extract_strided_slice %49 {offsets = [0, 128], sizes = [128, 128], strides = [1, 1]} : vector<128x256xf32> to vector<128x128xf32>
      %c0_25 = arith.constant 0 : index
      %c0_26 = arith.constant 0 : index
      %c0_27 = arith.constant 0 : index
      %54 = vector.load %arg7[%c0_25, %c0_26, %c0_27] : memref<1x1x128xf32, #tpu.memory_space<vmem>>, vector<1x1x128xf32>
      %55 = vector.shape_cast %54 : vector<1x1x128xf32> to vector<1x128xf32>
      %56 = vector.broadcast %55 : vector<1x128xf32> to vector<128x128xf32>
      %57 = arith.addf %53, %56 : vector<128x128xf32>
      %c0_28 = arith.constant 0 : index
      %c0_29 = arith.constant 0 : index
      %58 = vector.load %arg13[%c0_28, %c0_29] : memref<128x128xf32, #tpu.memory_space<vmem>>, vector<128x128xf32>
      tpu.vector_store %arg13[%c0_28, %c0_29], %57 {strides = array<i32>} : memref<128x128xf32, #tpu.memory_space<vmem>>, vector<128x128xf32>,
    } else {
    }
    %c128_i32 = arith.constant 128 : i32
    %3 = arith.muli %arg1, %c128_i32 : i32
    %4 = tpu.assume_multiple %3, 128 : i32
    %c0 = arith.constant 0 : index
    %c0_1 = arith.constant 0 : index
    %5 = vector.load %arg3[%c0, %c0_1] : memref<128x128xbf16, #tpu.memory_space<vmem>>, vector<128x128xbf16>
    %c0_2 = arith.constant 0 : index
    %c0_3 = arith.constant 0 : index
    %6 = vector.load %arg12[%c0_2, %c0_3] : memref<128x128xbf16, #tpu.memory_space<vmem>>, vector<128x128xbf16>
    %cst = arith.constant dense<0.000000e+00> : vector<128x128xf32>
    %7 = tpu.matmul %5, %6, %cst {dimension_numbers = #tpu.dot_dimension_numbers<[1], [0], [0], [1], [0, 0, 1, 1], [], []>} : vector<128x128xbf16>, vector<128x128xbf16>, vector<128x128xf32> -> vector<128x128xf32>
    %8 = arith.index_cast %4 : i32 to index
    %c0_4 = arith.constant 0 : index
    %9 = vector.load %arg13[%8, %c0_4] : memref<128x128xf32, #tpu.memory_space<vmem>>, vector<128x128xf32>
    %10 = arith.addf %7, %9 : vector<128x128xf32>
    %11 = arith.truncf %10 : vector<128x128xf32> to vector<128x128xbf16>
    %12 = math.absf %11 : vector<128x128xbf16>
    %cst_5 = arith.constant 0.000000e+00 : bf16
    %13 = vector.broadcast %cst_5 : bf16 to vector<128x128xbf16>
    %14 = arith.subf %13, %12 : vector<128x128xbf16>
    %15 = math.exp %14 : vector<128x128xbf16>
    %cst_6 = arith.constant 0.000000e+00 : bf16
    %16 = vector.broadcast %cst_6 : bf16 to vector<128x128xbf16>
    %17 = arith.cmpf ogt, %11, %16 : vector<128x128xbf16>
    %cst_7 = arith.constant 2.000000e+00 : bf16
    %18 = vector.broadcast %cst_7 : bf16 to vector<128x128xbf16>
    %19 = arith.mulf %18, %15 : vector<128x128xbf16>
    %cst_8 = arith.constant 1.000000e+00 : bf16
    %20 = vector.broadcast %cst_8 : bf16 to vector<128x128xbf16>
    %21 = arith.addf %20, %19 : vector<128x128xbf16>
    %22 = arith.mulf %15, %15 : vector<128x128xbf16>
    %cst_9 = arith.constant 2.000000e+00 : bf16
    %23 = vector.broadcast %cst_9 : bf16 to vector<128x128xbf16>
    %24 = arith.mulf %23, %15 : vector<128x128xbf16>
    %25 = arith.addf %22, %24 : vector<128x128xbf16>
    %26 = arith.select %17, %21, %25 : vector<128x128xi1>, vector<128x128xbf16>
    %cst_10 = arith.constant 0.000000e+00 : bf16
    %27 = vector.broadcast %cst_10 : bf16 to vector<128x128xbf16>
    %28 = arith.cmpf ogt, %11, %27 : vector<128x128xbf16>
    %cst_11 = arith.constant 2.000000e+00 : bf16
    %29 = vector.broadcast %cst_11 : bf16 to vector<128x128xbf16>
    %30 = arith.mulf %29, %15 : vector<128x128xbf16>
    %31 = arith.mulf %30, %15 : vector<128x128xbf16>
    %32 = arith.addf %26, %31 : vector<128x128xbf16>
    %cst_12 = arith.constant 2.000000e+00 : bf16
    %33 = vector.broadcast %cst_12 : bf16 to vector<128x128xbf16>
    %34 = arith.addf %26, %33 : vector<128x128xbf16>
    %35 = arith.select %28, %32, %34 : vector<128x128xi1>, vector<128x128xbf16>
    %36 = arith.mulf %11, %26 : vector<128x128xbf16>
    %37 = arith.divf %36, %35 : vector<128x128xbf16>
    %38 = arith.index_cast %4 : i32 to index
    %c0_13 = arith.constant 0 : index
    %39 = vector.load %arg11[%38, %c0_13] : memref<128x128xbf16, #tpu.memory_space<vmem>>, vector<128x128xbf16>
    tpu.vector_store %arg11[%38, %c0_13], %37 {strides = array<i32>} : memref<128x128xbf16, #tpu.memory_space<vmem>>, vector<128x128xbf16>,
    %c2_i32 = arith.constant 2 : i32
    %40 = arith.cmpi eq, %arg0, %c2_i32 : i32
    %41 = arith.extui %40 : i1 to i32
    %c0_i32_14 = arith.constant 0 : i32
    %42 = arith.cmpi ne, %41, %c0_i32_14 : i32
    scf.if %42 {
      %c0_15 = arith.constant 0 : index
      %c0_16 = arith.constant 0 : index
      %43 = vector.load %arg8[%c0_15, %c0_16] : memref<128x128xbf16, #tpu.memory_space<vmem>>, vector<128x128xbf16>
      %cst_17 = arith.constant dense<0.000000e+00> : vector<128x128xf32>
      %44 = tpu.matmul %37, %43, %cst_17 {dimension_numbers = #tpu.dot_dimension_numbers<[1], [0], [0], [1], [0, 0, 1, 1], [], []>} : vector<128x128xbf16>, vector<128x128xbf16>, vector<128x128xf32> -> vector<128x128xf32>
      %c0_18 = arith.constant 0 : index
      %c0_19 = arith.constant 0 : index
      %45 = vector.load %arg9[%c0_18, %c0_19] : memref<1x128xf32, #tpu.memory_space<vmem>>, vector<1x128xf32>
      %46 = vector.broadcast %45 : vector<1x128xf32> to vector<128x128xf32>
      %47 = arith.addf %44, %46 : vector<128x128xf32>
      %c0_20 = arith.constant 0 : index
      %c0_21 = arith.constant 0 : index
      %48 = vector.load %arg10[%c0_20, %c0_21] : memref<128x128xf32, #tpu.memory_space<vmem>>, vector<128x128xf32>
      tpu.vector_store %arg10[%c0_20, %c0_21], %47 {strides = array<i32>} : memref<128x128xf32, #tpu.memory_space<vmem>>, vector<128x128xf32>,
    } else {
    }
    return
  }
  func.func @transform_0(%arg0: i32, %arg1: i32) -> (i32, i32) {
    %c0_i32 = arith.constant 0 : i32
    %c0_i32_0 = arith.constant 0 : i32
    %c0_i32_1 = arith.constant 0 : i32
    return %c0_i32, %c0_i32_0 : i32, i32
  }
  func.func @transform_1(%arg0: i32, %arg1: i32) -> (i32, i32) {
    %c0_i32 = arith.constant 0 : i32
    %c0_i32_0 = arith.constant 0 : i32
    return %arg1, %c0_i32 : i32, i32
  }
  func.func @transform_2(%arg0: i32, %arg1: i32) -> (i32, i32) {
    %c0_i32 = arith.constant 0 : i32
    %c0_i32_0 = arith.constant 0 : i32
    %c0_i32_1 = arith.constant 0 : i32
    return %c0_i32, %c0_i32_0 : i32, i32
  }
  func.func @transform_3(%arg0: i32, %arg1: i32) -> (i32, i32) {
    %c0_i32 = arith.constant 0 : i32
    %c0_i32_0 = arith.constant 0 : i32
    %c0_i32_1 = arith.constant 0 : i32
    return %c0_i32, %c0_i32_0 : i32, i32
  }
  func.func @transform_4(%arg0: i32, %arg1: i32) -> (i32, i32, i32) {
    %c0_i32 = arith.constant 0 : i32
    %c0_i32_0 = arith.constant 0 : i32
    %c0_i32_1 = arith.constant 0 : i32
    return %arg0, %c0_i32, %c0_i32_0 : i32, i32, i32
  }
  func.func @transform_5(%arg0: i32, %arg1: i32) -> (i32, i32, i32) {
    %c0_i32 = arith.constant 0 : i32
    %c0_i32_0 = arith.constant 0 : i32
    %c0_i32_1 = arith.constant 0 : i32
    return %arg0, %c0_i32, %c0_i32_0 : i32, i32, i32
  }
  func.func @transform_6(%arg0: i32, %arg1: i32) -> (i32, i32) {
    %c0_i32 = arith.constant 0 : i32
    %c0_i32_0 = arith.constant 0 : i32
    %c0_i32_1 = arith.constant 0 : i32
    return %c0_i32, %c0_i32_0 : i32, i32
  }
  func.func @transform_7(%arg0: i32, %arg1: i32) -> (i32, i32) {
    %c0_i32 = arith.constant 0 : i32
    %c0_i32_0 = arith.constant 0 : i32
    %c0_i32_1 = arith.constant 0 : i32
    return %c0_i32, %c0_i32_0 : i32, i32
  }
  func.func @transform_8(%arg0: i32, %arg1: i32) -> (i32, i32) {
    %c0_i32 = arith.constant 0 : i32
    %c0_i32_0 = arith.constant 0 : i32
    return %arg1, %c0_i32 : i32, i32
  }
}

</mosaic_0001>

<llo_original>
// kernel: gnn_forward.1
$region0: #{gnn_forward.1}
  #allocation0 [shape = 'u32[]', space=smem, size = 0x4, offset = 0x4, fixed_abs, tag = 'smem constant byte address 0x4 - core index']
  #allocation1 [shape = 'u32[144,128]{1,0:T(1,128)}', space=vmem, size = 0x12000, scoped, tag = 'internal scratch']
  #allocation2 [shape = 'bf16[128,128]{1,0:T(8,128)(2,1)}', space=vmem, size = 0x8000, scoped, tag = 'scratch operand']
  #allocation3 [shape = 'bf16[128,128]{1,0:T(8,128)(2,1)}', space=vmem, size = 0x8000, scoped, tag = 'scratch operand']
  #allocation4 [shape = 'f32[128,128]{1,0:T(8,128)}', space=vmem, size = 0x10000, scoped, tag = 'scratch operand']
  %s0 = inlined_call_operand.vmem [shape: bf16[128,128], index: 0, kind: input, shape index: {}]
  %s1 = inlined_call_operand.vmem [shape: bf16[128,128], index: 1, kind: input, shape index: {}]
  %s2 = inlined_call_operand.vmem [shape: bf16[128,128], index: 2, kind: input, shape index: {}]
  %s3 = inlined_call_operand.vmem [shape: f32[1,128], index: 3, kind: input, shape index: {}]
  %s4 = inlined_call_operand.vmem [shape: bf16[3,128,256], index: 4, kind: input, shape index: {}]
  %s5 = inlined_call_operand.vmem [shape: f32[3,1,128], index: 5, kind: input, shape index: {}]
  %s6 = inlined_call_operand.vmem [shape: bf16[128,128], index: 6, kind: input, shape index: {}]
  %s7 = inlined_call_operand.vmem [shape: f32[1,128], index: 7, kind: input, shape index: {}]
  %s8 = inlined_call_operand.vmem [shape: f32[128,128], index: 8, kind: output, shape index: {}]
  %s9 = sld [smem:[#allocation0]]
  $region77: #{gnn_forward.1} parent=0
    _
  %s11 = ssub.s32 1, %s9
  %s12 = scalar_select 0, %s11, %s9
  loop: start=0, step=1, limit=5
  $region2: #{gnn_forward.1} parent=0 // loop_pre_header
    _
  $region3: #{gnn_forward.1} parent=0 // loop_header
    %s14 = sphi 0, %s18
    %p15 = scmp.ge.s32.totalorder %s14, 5
    %s21 = sphi 0, %s33
    %s22 = sphi 0, %s29
    %s23 = sphi 0, %s21
    %s24 = sphi 0, %s22
    %s25 = sphi 0, %s23
    %s26 = sphi 0, %s24
    %s34 = sphi 0, %s34
    %s36 = sphi 0, %s34
    %s37 = sphi 0, %s36
    %s51 = sphi 0, %s37
    %s57 = sphi 0, %s59
    %s60 = sphi 0, %s57
    %s61 = sphi 0, %s60
    %s77 = sphi 0, %s61
    %s81 = sphi 0, %s81
    %s83 = sphi 0, %s81
    %s84 = sphi 0, %s83
    %s98 = sphi 0, %s84
    %s102 = sphi 0, %s102
    %s104 = sphi 0, %s102
    %s105 = sphi 0, %s104
    %s119 = sphi 0, %s105
    %s125 = sphi 0, %s127
    %s128 = sphi 0, %s125
    %s129 = sphi 0, %s128
    %s145 = sphi 0, %s129
    %s151 = sphi 0, %s153
    %s154 = sphi 0, %s151
    %s155 = sphi 0, %s154
    %s171 = sphi 0, %s155
    %s175 = sphi 0, %s175
    %s177 = sphi 0, %s175
    %s178 = sphi 0, %s177
    %s192 = sphi 0, %s178
    %s196 = sphi 0, %s196
    %s198 = sphi 0, %s196
    %s199 = sphi 0, %s198
    %s213 = sphi 0, %s199
    %s219 = sphi 0, %s221
    %s222 = sphi 0, %s219
    %s223 = sphi 0, %s222
    %s239 = sphi 0, %s223
  $region4: #{gnn_forward.1} parent=0 // loop_header_branch
    %17 = sbr.rel (%p15) target = $region8
  $region5: #{gnn_forward.1} parent=0 // loop_body
    %s19 = ssub.s32 %s14, 1
    %s20 = ssub.s32 %s14, 2
    %s27 = sadd.s32 1, %s22
    %p28 = scmp.ge.s32.totalorder %s27, 1
    %s29 = scalar_select %p28, 0, %s27
    %s30 = sadd.s32 1, %s21
    %s31 = scalar_select %p28, %s30, %s21
    %p32 = scmp.ge.s32.totalorder %s31, 3
    %s33 = scalar_select %p32, 0, %s31
    %s35 = sadd.s32 %s34, 1
    %p38 = scmp.eq.s32.totalorder %s14, 2
    %p39 = scmp.ne.s32.totalorder %s34, %s36
    %p40 = scmp.eq.s32.totalorder %s14, 0
    %p41 = por %p39, %p40
    %p42 = scmp.ne.s32.totalorder %s34, %s36
    %p43 = scmp.eq.s32.totalorder %s19, 2
    %p44 = por %p42, %p43
    %p45 = scmp.ne.s32.totalorder %s36, %s37
    %p46 = scmp.eq.s32.totalorder %s19, 0
    %p47 = por %p45, %p46
    %p48 = scmp.ne.s32.totalorder %s36, %s37
    %p49 = scmp.eq.s32.totalorder %s20, 2
    %p50 = por %p48, %p49
    %p52 = scmp.ne.s32.totalorder %s37, %s51
    %p53 = scmp.eq.s32.totalorder %s20, 0
    %p54 = por %p52, %p53
    %s55 = ssub.s32 %s22, %s29
    %p56 = scmp.eq.s32.totalorder %s55, 0
    %s58 = sadd.s32 %s57, 1
    %s59 = scalar_select %p56, %s57, %s58
    %p62 = pneg %p56
    %p63 = scmp.eq.s32.totalorder %s14, 2
    %p64 = por %p62, %p63
    %p65 = scmp.ne.s32.totalorder %s57, %s60
    %p66 = scmp.eq.s32.totalorder %s14, 0
    %p67 = por %p65, %p66
    %p68 = scmp.ne.s32.totalorder %s57, %s60
    %p69 = scmp.eq.s32.totalorder %s19, 2
    %p70 = por %p68, %p69
    %p71 = scmp.ne.s32.totalorder %s60, %s61
    %p72 = scmp.eq.s32.totalorder %s19, 0
    %p73 = por %p71, %p72
    %p74 = scmp.ne.s32.totalorder %s60, %s61
    %p75 = scmp.eq.s32.totalorder %s20, 2
    %p76 = por %p74, %p75
    %p78 = scmp.ne.s32.totalorder %s61, %s77
    %p79 = scmp.eq.s32.totalorder %s20, 0
    %p80 = por %p78, %p79
    %s82 = sadd.s32 %s81, 1
    %p85 = scmp.eq.s32.totalorder %s14, 2
    %p86 = scmp.ne.s32.totalorder %s81, %s83
    %p87 = scmp.eq.s32.totalorder %s14, 0
    %p88 = por %p86, %p87
    %p89 = scmp.ne.s32.totalorder %s81, %s83
    %p90 = scmp.eq.s32.totalorder %s19, 2
    %p91 = por %p89, %p90
    %p92 = scmp.ne.s32.totalorder %s83, %s84
    %p93 = scmp.eq.s32.totalorder %s19, 0
    %p94 = por %p92, %p93
    %p95 = scmp.ne.s32.totalorder %s83, %s84
    %p96 = scmp.eq.s32.totalorder %s20, 2
    %p97 = por %p95, %p96
    %p99 = scmp.ne.s32.totalorder %s84, %s98
    %p100 = scmp.eq.s32.totalorder %s20, 0
    %p101 = por %p99, %p100
    %s103 = sadd.s32 %s102, 1
    %p106 = scmp.eq.s32.totalorder %s14, 2
    %p107 = scmp.ne.s32.totalorder %s102, %s104
    %p108 = scmp.eq.s32.totalorder %s14, 0
    %p109 = por %p107, %p108
    %p110 = scmp.ne.s32.totalorder %s102, %s104
    %p111 = scmp.eq.s32.totalorder %s19, 2
    %p112 = por %p110, %p111
    %p113 = scmp.ne.s32.totalorder %s104, %s105
    %p114 = scmp.eq.s32.totalorder %s19, 0
    %p115 = por %p113, %p114
    %p116 = scmp.ne.s32.totalorder %s104, %s105
    %p117 = scmp.eq.s32.totalorder %s20, 2
    %p118 = por %p116, %p117
    %p120 = scmp.ne.s32.totalorder %s105, %s119
    %p121 = scmp.eq.s32.totalorder %s20, 0
    %p122 = por %p120, %p121
    %s123 = ssub.s32 %s21, %s33
    %p124 = scmp.eq.s32.totalorder %s123, 0
    %s126 = sadd.s32 %s125, 1
    %s127 = scalar_select %p124, %s125, %s126
    %p130 = pneg %p124
    %p131 = scmp.eq.s32.totalorder %s14, 2
    %p132 = por %p130, %p131
    %p133 = scmp.ne.s32.totalorder %s125, %s128
    %p134 = scmp.eq.s32.totalorder %s14, 0
    %p135 = por %p133, %p134
    %p136 = scmp.ne.s32.totalorder %s125, %s128
    %p137 = scmp.eq.s32.totalorder %s19, 2
    %p138 = por %p136, %p137
    %p139 = scmp.ne.s32.totalorder %s128, %s129
    %p140 = scmp.eq.s32.totalorder %s19, 0
    %p141 = por %p139, %p140
    %p142 = scmp.ne.s32.totalorder %s128, %s129
    %p143 = scmp.eq.s32.totalorder %s20, 2
    %p144 = por %p142, %p143
    %p146 = scmp.ne.s32.totalorder %s129, %s145
    %p147 = scmp.eq.s32.totalorder %s20, 0
    %p148 = por %p146, %p147
    %s149 = ssub.s32 %s21, %s33
    %p150 = scmp.eq.s32.totalorder %s149, 0
    %s152 = sadd.s32 %s151, 1
    %s153 = scalar_select %p150, %s151, %s152
    %p156 = pneg %p150
    %p157 = scmp.eq.s32.totalorder %s14, 2
    %p158 = por %p156, %p157
    %p159 = scmp.ne.s32.totalorder %s151, %s154
    %p160 = scmp.eq.s32.totalorder %s14, 0
    %p161 = por %p159, %p160
    %p162 = scmp.ne.s32.totalorder %s151, %s154
    %p163 = scmp.eq.s32.totalorder %s19, 2
    %p164 = por %p162, %p163
    %p165 = scmp.ne.s32.totalorder %s154, %s155
    %p166 = scmp.eq.s32.totalorder %s19, 0
    %p167 = por %p165, %p166
    %p168 = scmp.ne.s32.totalorder %s154, %s155
    %p169 = scmp.eq.s32.totalorder %s20, 2
    %p170 = por %p168, %p169
    %p172 = scmp.ne.s32.totalorder %s155, %s171
    %p173 = scmp.eq.s32.totalorder %s20, 0
    %p174 = por %p172, %p173
    %s176 = sadd.s32 %s175, 1
    %p179 = scmp.eq.s32.totalorder %s14, 2
    %p180 = scmp.ne.s32.totalorder %s175, %s177
    %p181 = scmp.eq.s32.totalorder %s14, 0
    %p182 = por %p180, %p181
    %p183 = scmp.ne.s32.totalorder %s175, %s177
    %p184 = scmp.eq.s32.totalorder %s19, 2
    %p185 = por %p183, %p184
    %p186 = scmp.ne.s32.totalorder %s177, %s178
    %p187 = scmp.eq.s32.totalorder %s19, 0
    %p188 = por %p186, %p187
    %p189 = scmp.ne.s32.totalorder %s177, %s178
    %p190 = scmp.eq.s32.totalorder %s20, 2
    %p191 = por %p189, %p190
    %p193 = scmp.ne.s32.totalorder %s178, %s192
    %p194 = scmp.eq.s32.totalorder %s20, 0
    %p195 = por %p193, %p194
    %s197 = sadd.s32 %s196, 1
    %p200 = scmp.eq.s32.totalorder %s14, 2
    %p201 = scmp.ne.s32.totalorder %s196, %s198
    %p202 = scmp.eq.s32.totalorder %s14, 0
    %p203 = por %p201, %p202
    %p204 = scmp.ne.s32.totalorder %s196, %s198
    %p205 = scmp.eq.s32.totalorder %s19, 2
    %p206 = por %p204, %p205
    %p207 = scmp.ne.s32.totalorder %s198, %s199
    %p208 = scmp.eq.s32.totalorder %s19, 0
    %p209 = por %p207, %p208
    %p210 = scmp.ne.s32.totalorder %s198, %s199
    %p211 = scmp.eq.s32.totalorder %s20, 2
    %p212 = por %p210, %p211
    %p214 = scmp.ne.s32.totalorder %s199, %s213
    %p215 = scmp.eq.s32.totalorder %s20, 0
    %p216 = por %p214, %p215
    %s217 = ssub.s32 %s22, %s29
    %p218 = scmp.eq.s32.totalorder %s217, 0
    %s220 = sadd.s32 %s219, 1
    %s221 = scalar_select %p218, %s219, %s220
    %p224 = pneg %p218
    %p225 = scmp.eq.s32.totalorder %s14, 2
    %p226 = por %p224, %p225
    %p227 = scmp.ne.s32.totalorder %s219, %s222
    %p228 = scmp.eq.s32.totalorder %s14, 0
    %p229 = por %p227, %p228
    %p230 = scmp.ne.s32.totalorder %s219, %s222
    %p231 = scmp.eq.s32.totalorder %s19, 2
    %p232 = por %p230, %p231
    %p233 = scmp.ne.s32.totalorder %s222, %s223
    %p234 = scmp.eq.s32.totalorder %s19, 0
    %p235 = por %p233, %p234
    %p236 = scmp.ne.s32.totalorder %s222, %s223
    %p237 = scmp.eq.s32.totalorder %s20, 2
    %p238 = por %p236, %p237
    %p240 = scmp.ne.s32.totalorder %s223, %s239
    %p241 = scmp.eq.s32.totalorder %s20, 0
    %p242 = por %p240, %p241
    %p243 = scmp.le.s32.totalorder 1, %s14
    %p244 = scmp.lt.s32.totalorder %s14, 4
    %p245 = pnand %p243, %p244
    %p246 = pneg %p245
    // Predicated region
    $region9: #{gnn_forward.1} parent=5 // pred_check
      _
    $region10: #{gnn_forward.1} parent=5 // pred_check_branch
      %248 = sbr.rel (%p245) target = $region12
    $region11: #{gnn_forward.1} parent=5 // pred_region
      %s249 = ssub.s32 %s14, 1
      // Predicated region
      $region13: #{gnn_forward.1} parent=11 // pred_check
        %p250 = pneg %p47
      $region14: #{gnn_forward.1} parent=11 // pred_check_branch
        %252 = sbr.rel (%p250) target = $region16
      $region15: #{gnn_forward.1} parent=11 // pred_region
        _
      $region16: #{gnn_forward.1} parent=11 // pred_fallthru
        _
      // Predicated region
      $region17: #{gnn_forward.1} parent=11 // pred_check
        %p253 = pneg %p73
      $region18: #{gnn_forward.1} parent=11 // pred_check_branch
        %255 = sbr.rel (%p253) target = $region20
      $region19: #{gnn_forward.1} parent=11 // pred_region
        %s256 = smul.u32 16, %s24
        %p257 = scmp.lt.s32.totalorder %s256, 15
        %s258 = scalar_select %p257, %s256, 15
        %s259 = smul.addr %s258, 4
        %s260 = scalar_lea.vmem %s1, %s259
        %s261 = smul.u32 16, %s24
      $region20: #{gnn_forward.1} parent=11 // pred_fallthru
        _
      // Predicated region
      $region21: #{gnn_forward.1} parent=11 // pred_check
        %p262 = pneg %p94
      $region22: #{gnn_forward.1} parent=11 // pred_check_branch
        %264 = sbr.rel (%p262) target = $region24
      $region23: #{gnn_forward.1} parent=11 // pred_region
        _
      $region24: #{gnn_forward.1} parent=11 // pred_fallthru
        _
      // Predicated region
      $region25: #{gnn_forward.1} parent=11 // pred_check
        %p265 = pneg %p115
      $region26: #{gnn_forward.1} parent=11 // pred_check_branch
        %267 = sbr.rel (%p265) target = $region28
      $region27: #{gnn_forward.1} parent=11 // pred_region
        _
      $region28: #{gnn_forward.1} parent=11 // pred_fallthru
        _
      // Predicated region
      $region29: #{gnn_forward.1} parent=11 // pred_check
        %p268 = pneg %p188
      $region30: #{gnn_forward.1} parent=11 // pred_check_branch
        %270 = sbr.rel (%p268) target = $region32
      $region31: #{gnn_forward.1} parent=11 // pred_region
        _
      $region32: #{gnn_forward.1} parent=11 // pred_fallthru
        _
      // Predicated region
      $region33: #{gnn_forward.1} parent=11 // pred_check
        %p271 = pneg %p209
      $region34: #{gnn_forward.1} parent=11 // pred_check_branch
        %273 = sbr.rel (%p271) target = $region36
      $region35: #{gnn_forward.1} parent=11 // pred_region
        _
      $region36: #{gnn_forward.1} parent=11 // pred_fallthru
        _
    $region12: #{gnn_forward.1} parent=5 // pred_fallthru
      _
    %p274 = scmp.lt.s32.totalorder %s14, 3
    // Predicated region
    $region37: #{gnn_forward.1} parent=5 // pred_check
      %p275 = pneg %p274
    $region38: #{gnn_forward.1} parent=5 // pred_check_branch
      %277 = sbr.rel (%p275) target = $region40
    $region39: #{gnn_forward.1} parent=5 // pred_region
      // Predicated region
      $region41: #{gnn_forward.1} parent=39 // pred_check
        %p278 = pneg %p135
      $region42: #{gnn_forward.1} parent=39 // pred_check_branch
        %280 = sbr.rel (%p278) target = $region44
      $region43: #{gnn_forward.1} parent=39 // pred_region
        %p281 = scmp.lt.s32.totalorder %s21, 2
        %s282 = scalar_select %p281, %s21, 2
        %s283 = smul.addr %s282, 32
        %s284 = smul.addr %s283, 4
        %s285 = scalar_lea.vmem %s4, %s284
      $region44: #{gnn_forward.1} parent=39 // pred_fallthru
        _
      // Predicated region
      $region45: #{gnn_forward.1} parent=39 // pred_check
        %p286 = pneg %p161
      $region46: #{gnn_forward.1} parent=39 // pred_check_branch
        %288 = sbr.rel (%p286) target = $region48
      $region47: #{gnn_forward.1} parent=39 // pred_region
        %p289 = scmp.lt.s32.totalorder %s21, 2
        %s290 = scalar_select %p289, %s21, 2
        %s291 = scalar_lea.vmem %s5, %s290
      $region48: #{gnn_forward.1} parent=39 // pred_fallthru
        _
    $region40: #{gnn_forward.1} parent=5 // pred_fallthru
      _
    %p292 = scmp.le.s32.totalorder 1, %s14
    %p293 = scmp.lt.s32.totalorder %s14, 4
    %p294 = pnand %p292, %p293
    %p295 = pneg %p294
    // Predicated region
    $region49: #{gnn_forward.1} parent=5 // pred_check
      _
    $region50: #{gnn_forward.1} parent=5 // pred_check_branch
      %297 = sbr.rel (%p294) target = $region52
    $region51: #{gnn_forward.1} parent=5 // pred_region
      %s298 = ssub.s32 %s14, 1
      %p299 = pneg %p47
      %p300 = pneg %p44
      %s301 = smul.u32 16, %s24
      %p302 = scmp.lt.s32.totalorder %s301, 15
      %s303 = scalar_select %p302, %s301, 15
      %s304 = smul.addr %s303, 4
      %s305 = scalar_lea.vmem %s1, %s304
      %p306 = pneg %p73
      %p307 = pneg %p70
      %p308 = pneg %p94
      %p309 = pneg %p91
      %p310 = pneg %p115
      %p311 = pneg %p112
      %p312 = scmp.lt.s32.totalorder %s23, 2
      %s313 = scalar_select %p312, %s23, 2
      %s314 = smul.addr %s313, 32
      %s315 = smul.addr %s314, 4
      %s316 = scalar_lea.vmem %s4, %s315
      %p317 = pneg %p141
      %p318 = pneg %p138
      %p319 = scmp.lt.s32.totalorder %s23, 2
      %s320 = scalar_select %p319, %s23, 2
      %s321 = scalar_lea.vmem %s5, %s320
      %p322 = pneg %p167
      %p323 = pneg %p164
      %p324 = pneg %p188
      %p325 = pneg %p185
      %p326 = pneg %p209
      %p327 = pneg %p206
      %p328 = pneg %p235
      %p329 = pneg %p232
      %s330 = smul.u32 16, %s24
      %p331 = scmp.lt.s32.totalorder %s330, 15
      %s332 = scalar_select %p331, %s330, 15
      %s333 = smul.addr %s332, 8
      %s334 = scalar_lea.vmem %s8, %s333
      %s335 = smul.u32 16, %s24
      %p336 = scmp.lt.s32.totalorder %s335, 15
      %s337 = scalar_select %p336, %s335, 15
      %s338 = smul.addr %s337, 4
      %s339 = scalar_lea.vmem %s1, %s338
      %s340 = smul.u32 16, %s24
      %p341 = scmp.lt.s32.totalorder %s23, 2
      %s342 = scalar_select %p341, %s23, 2
      %s343 = smul.addr %s342, 32
      %s344 = smul.addr %s343, 4
      %s345 = scalar_lea.vmem %s4, %s344
      %p346 = scmp.lt.s32.totalorder %s23, 2
      %s347 = scalar_select %p346, %s23, 2
      %s348 = scalar_lea.vmem %s5, %s347
      %s349 = smul.u32 16, %s24
      %p350 = scmp.lt.s32.totalorder %s349, 15
      %s351 = scalar_select %p350, %s349, 15
      %s352 = smul.addr %s351, 8
      %s353 = scalar_lea.vmem %s8, %s352
      %s354 = smul.u32 16, %s24
      %p358 = scmp.eq.s32.totalorder %s24, 0
      // Predicated region
      $region53: #{gnn_forward.1} parent=51 // pred_check
        %p359 = pneg %p358
      $region54: #{gnn_forward.1} parent=51 // pred_check_branch
        %361 = sbr.rel (%p359) target = $region56
      $region55: #{gnn_forward.1} parent=51 // pred_region
        %p362 = scmp.eq.s32.totalorder %s23, 0
        // Predicated region
        $region57: #{gnn_forward.1} parent=55 // pred_check
          %p363 = pneg %p362
        $region58: #{gnn_forward.1} parent=55 // pred_check_branch
          %365 = sbr.rel (%p363) target = $region60
        $region59: #{gnn_forward.1} parent=55 // pred_region
          %v366 = vld [vmem:[%s0] sm:$0xf]
          %v367 = vld [vmem:[%s0 + $0x4] sm:$0xf]
          %v368 = vld [vmem:[%s0 + $0x8] sm:$0xf]
          %v369 = vld [vmem:[%s0 + $0xc] sm:$0xf]
          %v370 = vld [vmem:[%s0 + $0x10] sm:$0xf]
          %v371 = vld [vmem:[%s0 + $0x14] sm:$0xf]
          %v372 = vld [vmem:[%s0 + $0x18] sm:$0xf]
          %v373 = vld [vmem:[%s0 + $0x1c] sm:$0xf]
          %v374 = vld [vmem:[%s0 + $0x20] sm:$0xf]
          %v375 = vld [vmem:[%s0 + $0x24] sm:$0xf]
          %v376 = vld [vmem:[%s0 + $0x28] sm:$0xf]
          %v377 = vld [vmem:[%s0 + $0x2c] sm:$0xf]
          %v378 = vld [vmem:[%s0 + $0x30] sm:$0xf]
          %v379 = vld [vmem:[%s0 + $0x34] sm:$0xf]
          %v380 = vld [vmem:[%s0 + $0x38] sm:$0xf]
          %v381 = vld [vmem:[%s0 + $0x3c] sm:$0xf]
          %v382 = vld [vmem:[%s2] sm:$0xf]
          %v383 = vld [vmem:[%s2 + $0x4] sm:$0xf]
          %v384 = vld [vmem:[%s2 + $0x8] sm:$0xf]
          %v385 = vld [vmem:[%s2 + $0xc] sm:$0xf]
          %v386 = vld [vmem:[%s2 + $0x10] sm:$0xf]
          %v387 = vld [vmem:[%s2 + $0x14] sm:$0xf]
          %v388 = vld [vmem:[%s2 + $0x18] sm:$0xf]
          %v389 = vld [vmem:[%s2 + $0x1c] sm:$0xf]
          %v390 = vld [vmem:[%s2 + $0x20] sm:$0xf]
          %v391 = vld [vmem:[%s2 + $0x24] sm:$0xf]
          %v392 = vld [vmem:[%s2 + $0x28] sm:$0xf]
          %v393 = vld [vmem:[%s2 + $0x2c] sm:$0xf]
          %v394 = vld [vmem:[%s2 + $0x30] sm:$0xf]
          %v395 = vld [vmem:[%s2 + $0x34] sm:$0xf]
          %v396 = vld [vmem:[%s2 + $0x38] sm:$0xf]
          %v397 = vld [vmem:[%s2 + $0x3c] sm:$0xf]
          %v398 = vld [vmem:[%s3] sm:$0x1]
          %v400 = vlaneseq
          %v401 = vshrl.u32 %v400, 7
          %v402 = vsub.s32 0, %v401
          %v403 = vrot.slane %v398, %v402
          %v421 = vunpack.c.l.b16 %v366
          %v422 = vunpack.c.l.b16 %v367
          %v423 = vunpack.c.l.b16 %v368
          %v424 = vunpack.c.l.b16 %v369
          %v425 = vunpack.c.l.b16 %v370
          %v426 = vunpack.c.l.b16 %v371
          %v427 = vunpack.c.l.b16 %v372
          %v428 = vunpack.c.l.b16 %v373
          %v429 = vunpack.c.l.b16 %v374
          %v430 = vunpack.c.l.b16 %v375
          %v431 = vunpack.c.l.b16 %v376
          %v432 = vunpack.c.l.b16 %v377
          %v433 = vunpack.c.l.b16 %v378
          %v434 = vunpack.c.l.b16 %v379
          %v435 = vunpack.c.l.b16 %v380
          %v436 = vunpack.c.l.b16 %v381
          %v437 = vpack.c.b16 %v422, %v421
          %v438 = vpack.c.b16 %v424, %v423
          %v439 = vpack.c.b16 %v426, %v425
          %v440 = vpack.c.b16 %v428, %v427
          %v441 = vpack.c.b16 %v430, %v429
          %v442 = vpack.c.b16 %v432, %v431
          %v443 = vpack.c.b16 %v434, %v433
          %v444 = vpack.c.b16 %v436, %v435
          %v469 = vunpack.c.l.b16 %v382
          %v470 = vunpack.c.l.b16 %v383
          %v471 = vunpack.c.l.b16 %v384
          %v472 = vunpack.c.l.b16 %v385
          %v473 = vunpack.c.l.b16 %v386
          %v474 = vunpack.c.l.b16 %v387
          %v475 = vunpack.c.l.b16 %v388
          %v476 = vunpack.c.l.b16 %v389
          %v477 = vunpack.c.l.b16 %v390
          %v478 = vunpack.c.l.b16 %v391
          %v479 = vunpack.c.l.b16 %v392
          %v480 = vunpack.c.l.b16 %v393
          %v481 = vunpack.c.l.b16 %v394
          %v482 = vunpack.c.l.b16 %v395
          %v483 = vunpack.c.l.b16 %v396
          %v484 = vunpack.c.l.b16 %v397
          %v485 = vpack.c.b16 %v470, %v469
          %v486 = vpack.c.b16 %v472, %v471
          %v487 = vpack.c.b16 %v474, %v473
          %v488 = vpack.c.b16 %v476, %v475
          %v489 = vpack.c.b16 %v478, %v477
          %v490 = vpack.c.b16 %v480, %v479
          %v491 = vpack.c.b16 %v482, %v481
          %v492 = vpack.c.b16 %v484, %v483
          %501 = vmatprep.subr.bf16.mxu0 0
          %502 = vmatpush1.bf16.msra.mxu0 %v492
          %503 = vmatprep.subr.bf16.mxu0 0
          %504 = vmatpush1.bf16.msra.mxu0 %v491
          %505 = vmatprep.subr.bf16.mxu0 0
          %506 = vmatpush1.bf16.msra.mxu0 %v490
          %507 = vmatprep.subr.bf16.mxu0 0
          %508 = vmatpush1.bf16.msra.mxu0 %v489
          %509 = vmatprep.subr.bf16.mxu0 0
          %510 = vmatpush1.bf16.msra.mxu0 %v488
          %511 = vmatprep.subr.bf16.mxu0 0
          %512 = vmatpush1.bf16.msra.mxu0 %v487
          %513 = vmatprep.subr.bf16.mxu0 0
          %514 = vmatpush1.bf16.msra.mxu0 %v486
          %515 = vmatprep.subr.bf16.mxu0 0
          %516 = vmatpush1.bf16.msra.mxu0 %v485
          %517 = vmatprep.subr.bf16.mxu0 0
          %518 = vmatpush2.bf16.msra.mxu0 0
          %519 = vmatprep.subr.bf16.mxu0 0
          %520 = vmatpush2.bf16.msra.mxu0 0
          %521 = vmatprep.subr.bf16.mxu0 0
          %522 = vmatpush2.bf16.msra.mxu0 0
          %523 = vmatprep.subr.bf16.mxu0 0
          %524 = vmatpush2.bf16.msra.mxu0 0
          %525 = vmatprep.subr.bf16.mxu0 0
          %526 = vmatpush2.bf16.msra.mxu0 0
          %527 = vmatprep.subr.bf16.mxu0 0
          %528 = vmatpush2.bf16.msra.mxu0 0
          %529 = vmatprep.subr.bf16.mxu0 0
          %530 = vmatpush2.bf16.msra.mxu0 0
          %531 = vmatprep.subr.bf16.mxu0 0
          %532 = vmatpush2.bf16.msra.mxu0 0
          %533 = vmatprep.mubr.bf16.mxu0 0
          %534 = vmatmul.mubr.bf16.gmra.mxu0 %v437
          %v535 = vpop.f32.mrf.mxu0
          %v536 = vadd.f32 %v403, %v535
          %v537 = vpop.f32.mrf.mxu0
          %v538 = vpop.f32.mrf.mxu0
          %v539 = vadd.f32 %v403, %v538
          %v540 = vpop.f32.mrf.mxu0
          %541 = vmatprep.mubr.bf16.mxu0 0
          %542 = vmatmul.mubr.bf16.gmra.mxu0 %v438
          %v543 = vpop.f32.mrf.mxu0
          %v544 = vadd.f32 %v403, %v543
          %v545 = vpop.f32.mrf.mxu0
          %v546 = vpop.f32.mrf.mxu0
          %v547 = vadd.f32 %v403, %v546
          %v548 = vpop.f32.mrf.mxu0
          %549 = vmatprep.mubr.bf16.mxu0 0
          %550 = vmatmul.mubr.bf16.gmra.mxu0 %v439
          %v551 = vpop.f32.mrf.mxu0
          %v552 = vadd.f32 %v403, %v551
          %v553 = vpop.f32.mrf.mxu0
          %v554 = vpop.f32.mrf.mxu0
          %v555 = vadd.f32 %v403, %v554
          %v556 = vpop.f32.mrf.mxu0
          %557 = vmatprep.mubr.bf16.mxu0 0
          %558 = vmatmul.mubr.bf16.gmra.mxu0 %v440
          %v559 = vpop.f32.mrf.mxu0
          %v560 = vadd.f32 %v403, %v559
          %v561 = vpop.f32.mrf.mxu0
          %v562 = vpop.f32.mrf.mxu0
          %v563 = vadd.f32 %v403, %v562
          %v564 = vpop.f32.mrf.mxu0
          %565 = vmatprep.mubr.bf16.mxu0 0
          %566 = vmatmul.mubr.bf16.gmra.mxu0 %v441
          %v567 = vpop.f32.mrf.mxu0
          %v568 = vadd.f32 %v403, %v567
          %v569 = vpop.f32.mrf.mxu0
          %v570 = vpop.f32.mrf.mxu0
          %v571 = vadd.f32 %v403, %v570
          %v572 = vpop.f32.mrf.mxu0
          %573 = vmatprep.mubr.bf16.mxu0 0
          %574 = vmatmul.mubr.bf16.gmra.mxu0 %v442
          %v575 = vpop.f32.mrf.mxu0
          %v576 = vadd.f32 %v403, %v575
          %v577 = vpop.f32.mrf.mxu0
          %v578 = vpop.f32.mrf.mxu0
          %v579 = vadd.f32 %v403, %v578
          %v580 = vpop.f32.mrf.mxu0
          %581 = vmatprep.mubr.bf16.mxu0 0
          %582 = vmatmul.mubr.bf16.gmra.mxu0 %v443
          %v583 = vpop.f32.mrf.mxu0
          %v584 = vadd.f32 %v403, %v583
          %v585 = vpop.f32.mrf.mxu0
          %v586 = vpop.f32.mrf.mxu0
          %v587 = vadd.f32 %v403, %v586
          %v588 = vpop.f32.mrf.mxu0
          %589 = vmatprep.mubr.bf16.mxu0 0
          %590 = vmatmul.mubr.bf16.gmra.mxu0 %v444
          %v591 = vpop.f32.mrf.mxu0
          %v592 = vadd.f32 %v403, %v591
          %v593 = vpop.f32.mrf.mxu0
          %v594 = vpop.f32.mrf.mxu0
          %v595 = vadd.f32 %v403, %v594
          %v596 = vpop.f32.mrf.mxu0
          %597 = vdwg.mxu0
          %v598 = vpack.c.bf16 %v539, %v536
          %v599 = vpack.c.bf16 %v547, %v544
          %v600 = vpack.c.bf16 %v555, %v552
          %v601 = vpack.c.bf16 %v563, %v560
          %v602 = vpack.c.bf16 %v571, %v568
          %v603 = vpack.c.bf16 %v579, %v576
          %v604 = vpack.c.bf16 %v587, %v584
          %v605 = vpack.c.bf16 %v595, %v592
          %v606 = vand.u32 2147450879, %v598
          %v607 = vand.u32 2147450879, %v599
          %v608 = vand.u32 2147450879, %v600
          %v609 = vand.u32 2147450879, %v601
          %v610 = vand.u32 2147450879, %v602
          %v611 = vand.u32 2147450879, %v603
          %v612 = vand.u32 2147450879, %v604
          %v613 = vand.u32 2147450879, %v605
          %v614 = vsub.bf16 0, %v606
          %v615 = vsub.bf16 0, %v607
          %v616 = vsub.bf16 0, %v608
          %v617 = vsub.bf16 0, %v609
          %v618 = vsub.bf16 0, %v610
          %v619 = vsub.bf16 0, %v611
          %v620 = vsub.bf16 0, %v612
          %v621 = vsub.bf16 0, %v613
          %v623 = vmul.bf16 %v614, 1069105081
          %v624 = vpow.bf16.pop %v623
          %v626 = vmul.bf16 %v615, 1069105081
          %v627 = vpow.bf16.pop %v626
          %v629 = vmul.bf16 %v616, 1069105081
          %v630 = vpow.bf16.pop %v629
          %v632 = vmul.bf16 %v617, 1069105081
          %v633 = vpow.bf16.pop %v632
          %v635 = vmul.bf16 %v618, 1069105081
          %v636 = vpow.bf16.pop %v635
          %v638 = vmul.bf16 %v619, 1069105081
          %v639 = vpow.bf16.pop %v638
          %v641 = vmul.bf16 %v620, 1069105081
          %v642 = vpow.bf16.pop %v641
          %v644 = vmul.bf16 %v621, 1069105081
          %v645 = vpow.bf16.pop %v644
          %vm646 = vcmp.gt.bf16.partialorder %v598, 0
          %vm647 = vcmp.gt.bf16.partialorder %v599, 0
          %vm648 = vcmp.gt.bf16.partialorder %v600, 0
          %vm649 = vcmp.gt.bf16.partialorder %v601, 0
          %vm650 = vcmp.gt.bf16.partialorder %v602, 0
          %vm651 = vcmp.gt.bf16.partialorder %v603, 0
          %vm652 = vcmp.gt.bf16.partialorder %v604, 0
          %vm653 = vcmp.gt.bf16.partialorder %v605, 0
          %v654 = vmul.bf16 %v624, 1073758208
          %v655 = vmul.bf16 %v627, 1073758208
          %v656 = vmul.bf16 %v630, 1073758208
          %v657 = vmul.bf16 %v633, 1073758208
          %v658 = vmul.bf16 %v636, 1073758208
          %v659 = vmul.bf16 %v639, 1073758208
          %v660 = vmul.bf16 %v642, 1073758208
          %v661 = vmul.bf16 %v645, 1073758208
          %v662 = vadd.bf16 %v654, 1065369472
          %v663 = vadd.bf16 %v655, 1065369472
          %v664 = vadd.bf16 %v656, 1065369472
          %v665 = vadd.bf16 %v657, 1065369472
          %v666 = vadd.bf16 %v658, 1065369472
          %v667 = vadd.bf16 %v659, 1065369472
          %v668 = vadd.bf16 %v660, 1065369472
          %v669 = vadd.bf16 %v661, 1065369472
          %v670 = vmul.bf16 %v624, %v624
          %v671 = vmul.bf16 %v627, %v627
          %v672 = vmul.bf16 %v630, %v630
          %v673 = vmul.bf16 %v633, %v633
          %v674 = vmul.bf16 %v636, %v636
          %v675 = vmul.bf16 %v639, %v639
          %v676 = vmul.bf16 %v642, %v642
          %v677 = vmul.bf16 %v645, %v645
          %v678 = vadd.bf16 %v670, %v654
          %v679 = vadd.bf16 %v671, %v655
          %v680 = vadd.bf16 %v672, %v656
          %v681 = vadd.bf16 %v673, %v657
          %v682 = vadd.bf16 %v674, %v658
          %v683 = vadd.bf16 %v675, %v659
          %v684 = vadd.bf16 %v676, %v660
          %v685 = vadd.bf16 %v677, %v661
          %v686 = vsel %vm646, %v662, %v678
          %v687 = vsel %vm647, %v663, %v679
          %v688 = vsel %vm648, %v664, %v680
          %v689 = vsel %vm649, %v665, %v681
          %v690 = vsel %vm650, %v666, %v682
          %v691 = vsel %vm651, %v667, %v683
          %v692 = vsel %vm652, %v668, %v684
          %v693 = vsel %vm653, %v669, %v685
          %v694 = vmul.bf16 %v654, %v624
          %v695 = vmul.bf16 %v655, %v627
          %v696 = vmul.bf16 %v656, %v630
          %v697 = vmul.bf16 %v657, %v633
          %v698 = vmul.bf16 %v658, %v636
          %v699 = vmul.bf16 %v659, %v639
          %v700 = vmul.bf16 %v660, %v642
          %v701 = vmul.bf16 %v661, %v645
          %v702 = vadd.bf16 %v686, %v694
          %v703 = vadd.bf16 %v687, %v695
          %v704 = vadd.bf16 %v688, %v696
          %v705 = vadd.bf16 %v689, %v697
          %v706 = vadd.bf16 %v690, %v698
          %v707 = vadd.bf16 %v691, %v699
          %v708 = vadd.bf16 %v692, %v700
          %v709 = vadd.bf16 %v693, %v701
          %v710 = vadd.bf16 %v686, 1073758208
          %v711 = vadd.bf16 %v687, 1073758208
          %v712 = vadd.bf16 %v688, 1073758208
          %v713 = vadd.bf16 %v689, 1073758208
          %v714 = vadd.bf16 %v690, 1073758208
          %v715 = vadd.bf16 %v691, 1073758208
          %v716 = vadd.bf16 %v692, 1073758208
          %v717 = vadd.bf16 %v693, 1073758208
          %v718 = vsel %vm646, %v702, %v710
          %v719 = vsel %vm647, %v703, %v711
          %v720 = vsel %vm648, %v704, %v712
          %v721 = vsel %vm649, %v705, %v713
          %v722 = vsel %vm650, %v706, %v714
          %v723 = vsel %vm651, %v707, %v715
          %v724 = vsel %vm652, %v708, %v716
          %v725 = vsel %vm653, %v709, %v717
          %v726 = vmul.bf16 %v598, %v686
          %v727 = vmul.bf16 %v599, %v687
          %v728 = vmul.bf16 %v600, %v688
          %v729 = vmul.bf16 %v601, %v689
          %v730 = vmul.bf16 %v602, %v690
          %v731 = vmul.bf16 %v603, %v691
          %v732 = vmul.bf16 %v604, %v692
          %v733 = vmul.bf16 %v605, %v693
          %v734 = vrcp.bf16.pop %v718
          %v735 = vmul.bf16 %v726, %v734
          %v736 = vrcp.bf16.pop %v719
          %v737 = vmul.bf16 %v727, %v736
          %v738 = vrcp.bf16.pop %v720
          %v739 = vmul.bf16 %v728, %v738
          %v740 = vrcp.bf16.pop %v721
          %v741 = vmul.bf16 %v729, %v740
          %v742 = vrcp.bf16.pop %v722
          %v743 = vmul.bf16 %v730, %v742
          %v744 = vrcp.bf16.pop %v723
          %v745 = vmul.bf16 %v731, %v744
          %v746 = vrcp.bf16.pop %v724
          %v747 = vmul.bf16 %v732, %v746
          %v748 = vrcp.bf16.pop %v725
          %v749 = vmul.bf16 %v733, %v748
          %v758 = vunpack.c.l.b16 %v735
          %v759 = vunpack.c.h.b16 %v735
          %v760 = vunpack.c.l.b16 %v737
          %v761 = vunpack.c.h.b16 %v737
          %v762 = vunpack.c.l.b16 %v739
          %v763 = vunpack.c.h.b16 %v739
          %v764 = vunpack.c.l.b16 %v741
          %v765 = vunpack.c.h.b16 %v741
          %v766 = vunpack.c.l.b16 %v743
          %v767 = vunpack.c.h.b16 %v743
          %v768 = vunpack.c.l.b16 %v745
          %v769 = vunpack.c.h.b16 %v745
          %v770 = vunpack.c.l.b16 %v747
          %v771 = vunpack.c.h.b16 %v747
          %v772 = vunpack.c.l.b16 %v749
          %v773 = vunpack.c.h.b16 %v749
          %v774 = vpack.c.b16 %v758, %v758
          %v775 = vpack.c.b16 %v759, %v759
          %v776 = vpack.c.b16 %v760, %v760
          %v777 = vpack.c.b16 %v761, %v761
          %v778 = vpack.c.b16 %v762, %v762
          %v779 = vpack.c.b16 %v763, %v763
          %v780 = vpack.c.b16 %v764, %v764
          %v781 = vpack.c.b16 %v765, %v765
          %v782 = vpack.c.b16 %v766, %v766
          %v783 = vpack.c.b16 %v767, %v767
          %v784 = vpack.c.b16 %v768, %v768
          %v785 = vpack.c.b16 %v769, %v769
          %v786 = vpack.c.b16 %v770, %v770
          %v787 = vpack.c.b16 %v771, %v771
          %v788 = vpack.c.b16 %v772, %v772
          %v789 = vpack.c.b16 %v773, %v773
          %806 = vst [vmem:[#allocation2] sm:$0xf] %v774
          %807 = vst [vmem:[#allocation2 + $0x4] sm:$0xf] %v775
          %808 = vst [vmem:[#allocation2 + $0x8] sm:$0xf] %v776
          %809 = vst [vmem:[#allocation2 + $0xc] sm:$0xf] %v777
          %810 = vst [vmem:[#allocation2 + $0x10] sm:$0xf] %v778
          %811 = vst [vmem:[#allocation2 + $0x14] sm:$0xf] %v779
          %812 = vst [vmem:[#allocation2 + $0x18] sm:$0xf] %v780
          %813 = vst [vmem:[#allocation2 + $0x1c] sm:$0xf] %v781
          %814 = vst [vmem:[#allocation2 + $0x20] sm:$0xf] %v782
          %815 = vst [vmem:[#allocation2 + $0x24] sm:$0xf] %v783
          %816 = vst [vmem:[#allocation2 + $0x28] sm:$0xf] %v784
          %817 = vst [vmem:[#allocation2 + $0x2c] sm:$0xf] %v785
          %818 = vst [vmem:[#allocation2 + $0x30] sm:$0xf] %v786
          %819 = vst [vmem:[#allocation2 + $0x34] sm:$0xf] %v787
          %820 = vst [vmem:[#allocation2 + $0x38] sm:$0xf] %v788
          %821 = vst [vmem:[#allocation2 + $0x3c] sm:$0xf] %v789
        $region60: #{gnn_forward.1} parent=55 // pred_fallthru
          _
        %v822 = vld [vmem:[#allocation2] sm:$0xf]
        %v823 = vld [vmem:[#allocation2 + $0x4] sm:$0xf]
        %v824 = vld [vmem:[#allocation2 + $0x8] sm:$0xf]
        %v825 = vld [vmem:[#allocation2 + $0xc] sm:$0xf]
        %v826 = vld [vmem:[#allocation2 + $0x10] sm:$0xf]
        %v827 = vld [vmem:[#allocation2 + $0x14] sm:$0xf]
        %v828 = vld [vmem:[#allocation2 + $0x18] sm:$0xf]
        %v829 = vld [vmem:[#allocation2 + $0x1c] sm:$0xf]
        %v830 = vld [vmem:[#allocation2 + $0x20] sm:$0xf]
        %v831 = vld [vmem:[#allocation2 + $0x24] sm:$0xf]
        %v832 = vld [vmem:[#allocation2 + $0x28] sm:$0xf]
        %v833 = vld [vmem:[#allocation2 + $0x2c] sm:$0xf]
        %v834 = vld [vmem:[#allocation2 + $0x30] sm:$0xf]
        %v835 = vld [vmem:[#allocation2 + $0x34] sm:$0xf]
        %v836 = vld [vmem:[#allocation2 + $0x38] sm:$0xf]
        %v837 = vld [vmem:[#allocation2 + $0x3c] sm:$0xf]
        %v838 = vld [vmem:[%s345] sm:$0xff]
        %v839 = vld [vmem:[%s345 + $0x8] sm:$0xff]
        %v840 = vld [vmem:[%s345 + $0x10] sm:$0xff]
        %v841 = vld [vmem:[%s345 + $0x18] sm:$0xff]
        %v842 = vld [vmem:[%s345 + $0x20] sm:$0xff]
        %v843 = vld [vmem:[%s345 + $0x28] sm:$0xff]
        %v844 = vld [vmem:[%s345 + $0x30] sm:$0xff]
        %v845 = vld [vmem:[%s345 + $0x38] sm:$0xff]
        %v846 = vld [vmem:[%s345 + $0x40] sm:$0xff]
        %v847 = vld [vmem:[%s345 + $0x48] sm:$0xff]
        %v848 = vld [vmem:[%s345 + $0x50] sm:$0xff]
        %v849 = vld [vmem:[%s345 + $0x58] sm:$0xff]
        %v850 = vld [vmem:[%s345 + $0x60] sm:$0xff]
        %v851 = vld [vmem:[%s345 + $0x68] sm:$0xff]
        %v852 = vld [vmem:[%s345 + $0x70] sm:$0xff]
        %v853 = vld [vmem:[%s345 + $0x78] sm:$0xff]
        %v870 = vunpack.c.l.b16 %v822
        %v871 = vunpack.c.l.b16 %v823
        %v872 = vunpack.c.l.b16 %v824
        %v873 = vunpack.c.l.b16 %v825
        %v874 = vunpack.c.l.b16 %v826
        %v875 = vunpack.c.l.b16 %v827
        %v876 = vunpack.c.l.b16 %v828
        %v877 = vunpack.c.l.b16 %v829
        %v878 = vunpack.c.l.b16 %v830
        %v879 = vunpack.c.l.b16 %v831
        %v880 = vunpack.c.l.b16 %v832
        %v881 = vunpack.c.l.b16 %v833
        %v882 = vunpack.c.l.b16 %v834
        %v883 = vunpack.c.l.b16 %v835
        %v884 = vunpack.c.l.b16 %v836
        %v885 = vunpack.c.l.b16 %v837
        %v886 = vpack.c.b16 %v871, %v870
        %v887 = vpack.c.b16 %v873, %v872
        %v888 = vpack.c.b16 %v875, %v874
        %v889 = vpack.c.b16 %v877, %v876
        %v890 = vpack.c.b16 %v879, %v878
        %v891 = vpack.c.b16 %v881, %v880
        %v892 = vpack.c.b16 %v883, %v882
        %v893 = vpack.c.b16 %v885, %v884
        %v918 = vunpack.c.l.b16 %v838
        %v919 = vunpack.c.h.b16 %v838
        %v920 = vunpack.c.l.b16 %v839
        %v921 = vunpack.c.h.b16 %v839
        %v922 = vunpack.c.l.b16 %v840
        %v923 = vunpack.c.h.b16 %v840
        %v924 = vunpack.c.l.b16 %v841
        %v925 = vunpack.c.h.b16 %v841
        %v926 = vunpack.c.l.b16 %v842
        %v927 = vunpack.c.h.b16 %v842
        %v928 = vunpack.c.l.b16 %v843
        %v929 = vunpack.c.h.b16 %v843
        %v930 = vunpack.c.l.b16 %v844
        %v931 = vunpack.c.h.b16 %v844
        %v932 = vunpack.c.l.b16 %v845
        %v933 = vunpack.c.h.b16 %v845
        %v934 = vunpack.c.l.b16 %v846
        %v935 = vunpack.c.h.b16 %v846
        %v936 = vunpack.c.l.b16 %v847
        %v937 = vunpack.c.h.b16 %v847
        %v938 = vunpack.c.l.b16 %v848
        %v939 = vunpack.c.h.b16 %v848
        %v940 = vunpack.c.l.b16 %v849
        %v941 = vunpack.c.h.b16 %v849
        %v942 = vunpack.c.l.b16 %v850
        %v943 = vunpack.c.h.b16 %v850
        %v944 = vunpack.c.l.b16 %v851
        %v945 = vunpack.c.h.b16 %v851
        %v946 = vunpack.c.l.b16 %v852
        %v947 = vunpack.c.h.b16 %v852
        %v948 = vunpack.c.l.b16 %v853
        %v949 = vunpack.c.h.b16 %v853
        %v950 = vpack.c.b16 %v920, %v918
        %v951 = vpack.c.b16 %v921, %v919
        %v952 = vpack.c.b16 %v924, %v922
        %v953 = vpack.c.b16 %v925, %v923
        %v954 = vpack.c.b16 %v928, %v926
        %v955 = vpack.c.b16 %v929, %v927
        %v956 = vpack.c.b16 %v932, %v930
        %v957 = vpack.c.b16 %v933, %v931
        %v958 = vpack.c.b16 %v936, %v934
        %v959 = vpack.c.b16 %v937, %v935
        %v960 = vpack.c.b16 %v940, %v938
        %v961 = vpack.c.b16 %v941, %v939
        %v962 = vpack.c.b16 %v944, %v942
        %v963 = vpack.c.b16 %v945, %v943
        %v964 = vpack.c.b16 %v948, %v946
        %v965 = vpack.c.b16 %v949, %v947
        %982 = vmatprep.subr.bf16.mxu0 %v965
        %983 = vmatpush1.bf16.msra.mxu0 %v964
        %984 = vmatprep.subr.bf16.mxu0 %v963
        %985 = vmatpush1.bf16.msra.mxu0 %v962
        %986 = vmatprep.subr.bf16.mxu0 %v961
        %987 = vmatpush1.bf16.msra.mxu0 %v960
        %988 = vmatprep.subr.bf16.mxu0 %v959
        %989 = vmatpush1.bf16.msra.mxu0 %v958
        %990 = vmatprep.subr.bf16.mxu0 %v957
        %991 = vmatpush1.bf16.msra.mxu0 %v956
        %992 = vmatprep.subr.bf16.mxu0 %v955
        %993 = vmatpush1.bf16.msra.mxu0 %v954
        %994 = vmatprep.subr.bf16.mxu0 %v953
        %995 = vmatpush1.bf16.msra.mxu0 %v952
        %996 = vmatprep.subr.bf16.mxu0 %v951
        %997 = vmatpush1.bf16.msra.mxu0 %v950
        %998 = vmatprep.subr.bf16.mxu0 0
        %999 = vmatpush2.bf16.msra.mxu0 0
        %1000 = vmatprep.subr.bf16.mxu0 0
        %1001 = vmatpush2.bf16.msra.mxu0 0
        %1002 = vmatprep.subr.bf16.mxu0 0
        %1003 = vmatpush2.bf16.msra.mxu0 0
        %1004 = vmatprep.subr.bf16.mxu0 0
        %1005 = vmatpush2.bf16.msra.mxu0 0
        %1006 = vmatprep.subr.bf16.mxu0 0
        %1007 = vmatpush2.bf16.msra.mxu0 0
        %1008 = vmatprep.subr.bf16.mxu0 0
        %1009 = vmatpush2.bf16.msra.mxu0 0
        %1010 = vmatprep.subr.bf16.mxu0 0
        %1011 = vmatpush2.bf16.msra.mxu0 0
        %1012 = vmatprep.subr.bf16.mxu0 0
        %1013 = vmatpush2.bf16.msra.mxu0 0
        %1014 = vmatprep.mubr.bf16.mxu0 0
        %1015 = vmatmul.mubr.bf16.gmra.mxu0 %v886
        %v1016 = vpop.f32.mrf.mxu0
        %v1017 = vadd.f32 0.0, %v1016
        %v1018 = vpop.f32.mrf.mxu0
        %v1019 = vadd.f32 0.0, %v1018
        %v1020 = vpop.f32.mrf.mxu0
        %v1021 = vadd.f32 0.0, %v1020
        %v1022 = vpop.f32.mrf.mxu0
        %v1023 = vadd.f32 0.0, %v1022
        %1024 = vmatprep.mubr.bf16.mxu0 0
        %1025 = vmatmul.mubr.bf16.gmra.mxu0 %v887
        %v1026 = vpop.f32.mrf.mxu0
        %v1027 = vadd.f32 0.0, %v1026
        %v1028 = vpop.f32.mrf.mxu0
        %v1029 = vadd.f32 0.0, %v1028
        %v1030 = vpop.f32.mrf.mxu0
        %v1031 = vadd.f32 0.0, %v1030
        %v1032 = vpop.f32.mrf.mxu0
        %v1033 = vadd.f32 0.0, %v1032
        %1034 = vmatprep.mubr.bf16.mxu0 0
        %1035 = vmatmul.mubr.bf16.gmra.mxu0 %v888
        %v1036 = vpop.f32.mrf.mxu0
        %v1037 = vadd.f32 0.0, %v1036
        %v1038 = vpop.f32.mrf.mxu0
        %v1039 = vadd.f32 0.0, %v1038
        %v1040 = vpop.f32.mrf.mxu0
        %v1041 = vadd.f32 0.0, %v1040
        %v1042 = vpop.f32.mrf.mxu0
        %v1043 = vadd.f32 0.0, %v1042
        %1044 = vmatprep.mubr.bf16.mxu0 0
        %1045 = vmatmul.mubr.bf16.gmra.mxu0 %v889
        %v1046 = vpop.f32.mrf.mxu0
        %v1047 = vadd.f32 0.0, %v1046
        %v1048 = vpop.f32.mrf.mxu0
        %v1049 = vadd.f32 0.0, %v1048
        %v1050 = vpop.f32.mrf.mxu0
        %v1051 = vadd.f32 0.0, %v1050
        %v1052 = vpop.f32.mrf.mxu0
        %v1053 = vadd.f32 0.0, %v1052
        %1054 = vmatprep.mubr.bf16.mxu0 0
        %1055 = vmatmul.mubr.bf16.gmra.mxu0 %v890
        %v1056 = vpop.f32.mrf.mxu0
        %v1057 = vadd.f32 0.0, %v1056
        %v1058 = vpop.f32.mrf.mxu0
        %v1059 = vadd.f32 0.0, %v1058
        %v1060 = vpop.f32.mrf.mxu0
        %v1061 = vadd.f32 0.0, %v1060
        %v1062 = vpop.f32.mrf.mxu0
        %v1063 = vadd.f32 0.0, %v1062
        %1064 = vmatprep.mubr.bf16.mxu0 0
        %1065 = vmatmul.mubr.bf16.gmra.mxu0 %v891
        %v1066 = vpop.f32.mrf.mxu0
        %v1067 = vadd.f32 0.0, %v1066
        %v1068 = vpop.f32.mrf.mxu0
        %v1069 = vadd.f32 0.0, %v1068
        %v1070 = vpop.f32.mrf.mxu0
        %v1071 = vadd.f32 0.0, %v1070
        %v1072 = vpop.f32.mrf.mxu0
        %v1073 = vadd.f32 0.0, %v1072
        %1074 = vmatprep.mubr.bf16.mxu0 0
        %1075 = vmatmul.mubr.bf16.gmra.mxu0 %v892
        %v1076 = vpop.f32.mrf.mxu0
        %v1077 = vadd.f32 0.0, %v1076
        %v1078 = vpop.f32.mrf.mxu0
        %v1079 = vadd.f32 0.0, %v1078
        %v1080 = vpop.f32.mrf.mxu0
        %v1081 = vadd.f32 0.0, %v1080
        %v1082 = vpop.f32.mrf.mxu0
        %v1083 = vadd.f32 0.0, %v1082
        %1084 = vmatprep.mubr.bf16.mxu0 0
        %1085 = vmatmul.mubr.bf16.gmra.mxu0 %v893
        %v1086 = vpop.f32.mrf.mxu0
        %v1087 = vadd.f32 0.0, %v1086
        %v1088 = vpop.f32.mrf.mxu0
        %v1089 = vadd.f32 0.0, %v1088
        %v1090 = vpop.f32.mrf.mxu0
        %v1091 = vadd.f32 0.0, %v1090
        %v1092 = vpop.f32.mrf.mxu0
        %v1093 = vadd.f32 0.0, %v1092
        %1094 = vdwg.mxu0
        %v1095 = vpack.c.bf16 %v1021, %v1017
        %v1096 = vpack.c.bf16 %v1031, %v1027
        %v1097 = vpack.c.bf16 %v1041, %v1037
        %v1098 = vpack.c.bf16 %v1051, %v1047
        %v1099 = vpack.c.bf16 %v1061, %v1057
        %v1100 = vpack.c.bf16 %v1071, %v1067
        %v1101 = vpack.c.bf16 %v1081, %v1077
        %v1102 = vpack.c.bf16 %v1091, %v1087
        %v1111 = vunpack.c.l.b16 %v1095
        %v1112 = vunpack.c.h.b16 %v1095
        %v1113 = vunpack.c.l.b16 %v1096
        %v1114 = vunpack.c.h.b16 %v1096
        %v1115 = vunpack.c.l.b16 %v1097
        %v1116 = vunpack.c.h.b16 %v1097
        %v1117 = vunpack.c.l.b16 %v1098
        %v1118 = vunpack.c.h.b16 %v1098
        %v1119 = vunpack.c.l.b16 %v1099
        %v1120 = vunpack.c.h.b16 %v1099
        %v1121 = vunpack.c.l.b16 %v1100
        %v1122 = vunpack.c.h.b16 %v1100
        %v1123 = vunpack.c.l.b16 %v1101
        %v1124 = vunpack.c.h.b16 %v1101
        %v1125 = vunpack.c.l.b16 %v1102
        %v1126 = vunpack.c.h.b16 %v1102
        %v1127 = vpack.c.b16 %v1111, %v1111
        %v1128 = vpack.c.b16 %v1112, %v1112
        %v1129 = vpack.c.b16 %v1113, %v1113
        %v1130 = vpack.c.b16 %v1114, %v1114
        %v1131 = vpack.c.b16 %v1115, %v1115
        %v1132 = vpack.c.b16 %v1116, %v1116
        %v1133 = vpack.c.b16 %v1117, %v1117
        %v1134 = vpack.c.b16 %v1118, %v1118
        %v1135 = vpack.c.b16 %v1119, %v1119
        %v1136 = vpack.c.b16 %v1120, %v1120
        %v1137 = vpack.c.b16 %v1121, %v1121
        %v1138 = vpack.c.b16 %v1122, %v1122
        %v1139 = vpack.c.b16 %v1123, %v1123
        %v1140 = vpack.c.b16 %v1124, %v1124
        %v1141 = vpack.c.b16 %v1125, %v1125
        %v1142 = vpack.c.b16 %v1126, %v1126
        %1159 = vst [vmem:[#allocation3] sm:$0xf] %v1127
        %1160 = vst [vmem:[#allocation3 + $0x4] sm:$0xf] %v1128
        %1161 = vst [vmem:[#allocation3 + $0x8] sm:$0xf] %v1129
        %1162 = vst [vmem:[#allocation3 + $0xc] sm:$0xf] %v1130
        %1163 = vst [vmem:[#allocation3 + $0x10] sm:$0xf] %v1131
        %1164 = vst [vmem:[#allocation3 + $0x14] sm:$0xf] %v1132
        %1165 = vst [vmem:[#allocation3 + $0x18] sm:$0xf] %v1133
        %1166 = vst [vmem:[#allocation3 + $0x1c] sm:$0xf] %v1134
        %1167 = vst [vmem:[#allocation3 + $0x20] sm:$0xf] %v1135
        %1168 = vst [vmem:[#allocation3 + $0x24] sm:$0xf] %v1136
        %1169 = vst [vmem:[#allocation3 + $0x28] sm:$0xf] %v1137
        %1170 = vst [vmem:[#allocation3 + $0x2c] sm:$0xf] %v1138
        %1171 = vst [vmem:[#allocation3 + $0x30] sm:$0xf] %v1139
        %1172 = vst [vmem:[#allocation3 + $0x34] sm:$0xf] %v1140
        %1173 = vst [vmem:[#allocation3 + $0x38] sm:$0xf] %v1141
        %1174 = vst [vmem:[#allocation3 + $0x3c] sm:$0xf] %v1142
        %v1175 = vld [vmem:[%s348] sm:$0x1]
        %v1177 = vlaneseq
        %v1178 = vshrl.u32 %v1177, 7
        %v1179 = vsub.s32 0, %v1178
        %v1180 = vrot.slane %v1175, %v1179
        %v1182 = vadd.f32 %v1019, %v1180
        %v1183 = vadd.f32 %v1023, %v1180
        %v1184 = vadd.f32 %v1029, %v1180
        %v1185 = vadd.f32 %v1033, %v1180
        %v1186 = vadd.f32 %v1039, %v1180
        %v1187 = vadd.f32 %v1043, %v1180
        %v1188 = vadd.f32 %v1049, %v1180
        %v1189 = vadd.f32 %v1053, %v1180
        %v1190 = vadd.f32 %v1059, %v1180
        %v1191 = vadd.f32 %v1063, %v1180
        %v1192 = vadd.f32 %v1069, %v1180
        %v1193 = vadd.f32 %v1073, %v1180
        %v1194 = vadd.f32 %v1079, %v1180
        %v1195 = vadd.f32 %v1083, %v1180
        %v1196 = vadd.f32 %v1089, %v1180
        %v1197 = vadd.f32 %v1093, %v1180
        %1198 = vst [vmem:[#allocation4] sm:$0xff] %v1182
        %1199 = vst [vmem:[#allocation4 + $0x8] sm:$0xff] %v1183
        %1200 = vst [vmem:[#allocation4 + $0x10] sm:$0xff] %v1184
        %1201 = vst [vmem:[#allocation4 + $0x18] sm:$0xff] %v1185
        %1202 = vst [vmem:[#allocation4 + $0x20] sm:$0xff] %v1186
        %1203 = vst [vmem:[#allocation4 + $0x28] sm:$0xff] %v1187
        %1204 = vst [vmem:[#allocation4 + $0x30] sm:$0xff] %v1188
        %1205 = vst [vmem:[#allocation4 + $0x38] sm:$0xff] %v1189
        %1206 = vst [vmem:[#allocation4 + $0x40] sm:$0xff] %v1190
        %1207 = vst [vmem:[#allocation4 + $0x48] sm:$0xff] %v1191
        %1208 = vst [vmem:[#allocation4 + $0x50] sm:$0xff] %v1192
        %1209 = vst [vmem:[#allocation4 + $0x58] sm:$0xff] %v1193
        %1210 = vst [vmem:[#allocation4 + $0x60] sm:$0xff] %v1194
        %1211 = vst [vmem:[#allocation4 + $0x68] sm:$0xff] %v1195
        %1212 = vst [vmem:[#allocation4 + $0x70] sm:$0xff] %v1196
        %1213 = vst [vmem:[#allocation4 + $0x78] sm:$0xff] %v1197
      $region56: #{gnn_forward.1} parent=51 // pred_fallthru
        _
      %s1214 = smul.u32 %s24, 128
      %v1215 = vld [vmem:[%s339] sm:$0xf]
      %v1216 = vld [vmem:[%s339 + $0x4] sm:$0xf]
      %v1217 = vld [vmem:[%s339 + $0x8] sm:$0xf]
      %v1218 = vld [vmem:[%s339 + $0xc] sm:$0xf]
      %v1219 = vld [vmem:[%s339 + $0x10] sm:$0xf]
      %v1220 = vld [vmem:[%s339 + $0x14] sm:$0xf]
      %v1221 = vld [vmem:[%s339 + $0x18] sm:$0xf]
      %v1222 = vld [vmem:[%s339 + $0x1c] sm:$0xf]
      %v1223 = vld [vmem:[%s339 + $0x20] sm:$0xf]
      %v1224 = vld [vmem:[%s339 + $0x24] sm:$0xf]
      %v1225 = vld [vmem:[%s339 + $0x28] sm:$0xf]
      %v1226 = vld [vmem:[%s339 + $0x2c] sm:$0xf]
      %v1227 = vld [vmem:[%s339 + $0x30] sm:$0xf]
      %v1228 = vld [vmem:[%s339 + $0x34] sm:$0xf]
      %v1229 = vld [vmem:[%s339 + $0x38] sm:$0xf]
      %v1230 = vld [vmem:[%s339 + $0x3c] sm:$0xf]
      %v1231 = vld [vmem:[#allocation3] sm:$0xf]
      %v1232 = vld [vmem:[#allocation3 + $0x4] sm:$0xf]
      %v1233 = vld [vmem:[#allocation3 + $0x8] sm:$0xf]
      %v1234 = vld [vmem:[#allocation3 + $0xc] sm:$0xf]
      %v1235 = vld [vmem:[#allocation3 + $0x10] sm:$0xf]
      %v1236 = vld [vmem:[#allocation3 + $0x14] sm:$0xf]
      %v1237 = vld [vmem:[#allocation3 + $0x18] sm:$0xf]
      %v1238 = vld [vmem:[#allocation3 + $0x1c] sm:$0xf]
      %v1239 = vld [vmem:[#allocation3 + $0x20] sm:$0xf]
      %v1240 = vld [vmem:[#allocation3 + $0x24] sm:$0xf]
      %v1241 = vld [vmem:[#allocation3 + $0x28] sm:$0xf]
      %v1242 = vld [vmem:[#allocation3 + $0x2c] sm:$0xf]
      %v1243 = vld [vmem:[#allocation3 + $0x30] sm:$0xf]
      %v1244 = vld [vmem:[#allocation3 + $0x34] sm:$0xf]
      %v1245 = vld [vmem:[#allocation3 + $0x38] sm:$0xf]
      %v1246 = vld [vmem:[#allocation3 + $0x3c] sm:$0xf]
      %s1247 = scalar_lea.vmem [#allocation4], %s1214
      %v1248 = vld [vmem:[%s1247] sm:$0xff]
      %v1249 = vld [vmem:[%s1247 + $0x8] sm:$0xff]
      %v1250 = vld [vmem:[%s1247 + $0x10] sm:$0xff]
      %v1251 = vld [vmem:[%s1247 + $0x18] sm:$0xff]
      %v1252 = vld [vmem:[%s1247 + $0x20] sm:$0xff]
      %v1253 = vld [vmem:[%s1247 + $0x28] sm:$0xff]
      %v1254 = vld [vmem:[%s1247 + $0x30] sm:$0xff]
      %v1255 = vld [vmem:[%s1247 + $0x38] sm:$0xff]
      %v1256 = vld [vmem:[%s1247 + $0x40] sm:$0xff]
      %v1257 = vld [vmem:[%s1247 + $0x48] sm:$0xff]
      %v1258 = vld [vmem:[%s1247 + $0x50] sm:$0xff]
      %v1259 = vld [vmem:[%s1247 + $0x58] sm:$0xff]
      %v1260 = vld [vmem:[%s1247 + $0x60] sm:$0xff]
      %v1261 = vld [vmem:[%s1247 + $0x68] sm:$0xff]
      %v1262 = vld [vmem:[%s1247 + $0x70] sm:$0xff]
      %v1263 = vld [vmem:[%s1247 + $0x78] sm:$0xff]
      %v1280 = vunpack.c.l.b16 %v1215
      %v1281 = vunpack.c.l.b16 %v1216
      %v1282 = vunpack.c.l.b16 %v1217
      %v1283 = vunpack.c.l.b16 %v1218
      %v1284 = vunpack.c.l.b16 %v1219
      %v1285 = vunpack.c.l.b16 %v1220
      %v1286 = vunpack.c.l.b16 %v1221
      %v1287 = vunpack.c.l.b16 %v1222
      %v1288 = vunpack.c.l.b16 %v1223
      %v1289 = vunpack.c.l.b16 %v1224
      %v1290 = vunpack.c.l.b16 %v1225
      %v1291 = vunpack.c.l.b16 %v1226
      %v1292 = vunpack.c.l.b16 %v1227
      %v1293 = vunpack.c.l.b16 %v1228
      %v1294 = vunpack.c.l.b16 %v1229
      %v1295 = vunpack.c.l.b16 %v1230
      %v1296 = vpack.c.b16 %v1281, %v1280
      %v1297 = vpack.c.b16 %v1283, %v1282
      %v1298 = vpack.c.b16 %v1285, %v1284
      %v1299 = vpack.c.b16 %v1287, %v1286
      %v1300 = vpack.c.b16 %v1289, %v1288
      %v1301 = vpack.c.b16 %v1291, %v1290
      %v1302 = vpack.c.b16 %v1293, %v1292
      %v1303 = vpack.c.b16 %v1295, %v1294
      %v1328 = vunpack.c.l.b16 %v1231
      %v1329 = vunpack.c.l.b16 %v1232
      %v1330 = vunpack.c.l.b16 %v1233
      %v1331 = vunpack.c.l.b16 %v1234
      %v1332 = vunpack.c.l.b16 %v1235
      %v1333 = vunpack.c.l.b16 %v1236
      %v1334 = vunpack.c.l.b16 %v1237
      %v1335 = vunpack.c.l.b16 %v1238
      %v1336 = vunpack.c.l.b16 %v1239
      %v1337 = vunpack.c.l.b16 %v1240
      %v1338 = vunpack.c.l.b16 %v1241
      %v1339 = vunpack.c.l.b16 %v1242
      %v1340 = vunpack.c.l.b16 %v1243
      %v1341 = vunpack.c.l.b16 %v1244
      %v1342 = vunpack.c.l.b16 %v1245
      %v1343 = vunpack.c.l.b16 %v1246
      %v1344 = vpack.c.b16 %v1329, %v1328
      %v1345 = vpack.c.b16 %v1331, %v1330
      %v1346 = vpack.c.b16 %v1333, %v1332
      %v1347 = vpack.c.b16 %v1335, %v1334
      %v1348 = vpack.c.b16 %v1337, %v1336
      %v1349 = vpack.c.b16 %v1339, %v1338
      %v1350 = vpack.c.b16 %v1341, %v1340
      %v1351 = vpack.c.b16 %v1343, %v1342
      %1360 = vmatprep.subr.bf16.mxu0 0
      %1361 = vmatpush1.bf16.msra.mxu0 %v1351
      %1362 = vmatprep.subr.bf16.mxu0 0
      %1363 = vmatpush1.bf16.msra.mxu0 %v1350
      %1364 = vmatprep.subr.bf16.mxu0 0
      %1365 = vmatpush1.bf16.msra.mxu0 %v1349
      %1366 = vmatprep.subr.bf16.mxu0 0
      %1367 = vmatpush1.bf16.msra.mxu0 %v1348
      %1368 = vmatprep.subr.bf16.mxu0 0
      %1369 = vmatpush1.bf16.msra.mxu0 %v1347
      %1370 = vmatprep.subr.bf16.mxu0 0
      %1371 = vmatpush1.bf16.msra.mxu0 %v1346
      %1372 = vmatprep.subr.bf16.mxu0 0
      %1373 = vmatpush1.bf16.msra.mxu0 %v1345
      %1374 = vmatprep.subr.bf16.mxu0 0
      %1375 = vmatpush1.bf16.msra.mxu0 %v1344
      %1376 = vmatprep.subr.bf16.mxu0 0
      %1377 = vmatpush2.bf16.msra.mxu0 0
      %1378 = vmatprep.subr.bf16.mxu0 0
      %1379 = vmatpush2.bf16.msra.mxu0 0
      %1380 = vmatprep.subr.bf16.mxu0 0
      %1381 = vmatpush2.bf16.msra.mxu0 0
      %1382 = vmatprep.subr.bf16.mxu0 0
      %1383 = vmatpush2.bf16.msra.mxu0 0
      %1384 = vmatprep.subr.bf16.mxu0 0
      %1385 = vmatpush2.bf16.msra.mxu0 0
      %1386 = vmatprep.subr.bf16.mxu0 0
      %1387 = vmatpush2.bf16.msra.mxu0 0
      %1388 = vmatprep.subr.bf16.mxu0 0
      %1389 = vmatpush2.bf16.msra.mxu0 0
      %1390 = vmatprep.subr.bf16.mxu0 0
      %1391 = vmatpush2.bf16.msra.mxu0 0
      %1392 = vmatprep.mubr.bf16.mxu0 0
      %1393 = vmatmul.mubr.bf16.gmra.mxu0 %v1296
      %v1394 = vpop.f32.mrf.mxu0
      %v1395 = vadd.f32 %v1248, %v1394
      %v1396 = vpop.f32.mrf.mxu0
      %v1397 = vpop.f32.mrf.mxu0
      %v1398 = vadd.f32 %v1249, %v1397
      %v1399 = vpop.f32.mrf.mxu0
      %1400 = vmatprep.mubr.bf16.mxu0 0
      %1401 = vmatmul.mubr.bf16.gmra.mxu0 %v1297
      %v1402 = vpop.f32.mrf.mxu0
      %v1403 = vadd.f32 %v1250, %v1402
      %v1404 = vpop.f32.mrf.mxu0
      %v1405 = vpop.f32.mrf.mxu0
      %v1406 = vadd.f32 %v1251, %v1405
      %v1407 = vpop.f32.mrf.mxu0
      %1408 = vmatprep.mubr.bf16.mxu0 0
      %1409 = vmatmul.mubr.bf16.gmra.mxu0 %v1298
      %v1410 = vpop.f32.mrf.mxu0
      %v1411 = vadd.f32 %v1252, %v1410
      %v1412 = vpop.f32.mrf.mxu0
      %v1413 = vpop.f32.mrf.mxu0
      %v1414 = vadd.f32 %v1253, %v1413
      %v1415 = vpop.f32.mrf.mxu0
      %1416 = vmatprep.mubr.bf16.mxu0 0
      %1417 = vmatmul.mubr.bf16.gmra.mxu0 %v1299
      %v1418 = vpop.f32.mrf.mxu0
      %v1419 = vadd.f32 %v1254, %v1418
      %v1420 = vpop.f32.mrf.mxu0
      %v1421 = vpop.f32.mrf.mxu0
      %v1422 = vadd.f32 %v1255, %v1421
      %v1423 = vpop.f32.mrf.mxu0
      %1424 = vmatprep.mubr.bf16.mxu0 0
      %1425 = vmatmul.mubr.bf16.gmra.mxu0 %v1300
      %v1426 = vpop.f32.mrf.mxu0
      %v1427 = vadd.f32 %v1256, %v1426
      %v1428 = vpop.f32.mrf.mxu0
      %v1429 = vpop.f32.mrf.mxu0
      %v1430 = vadd.f32 %v1257, %v1429
      %v1431 = vpop.f32.mrf.mxu0
      %1432 = vmatprep.mubr.bf16.mxu0 0
      %1433 = vmatmul.mubr.bf16.gmra.mxu0 %v1301
      %v1434 = vpop.f32.mrf.mxu0
      %v1435 = vadd.f32 %v1258, %v1434
      %v1436 = vpop.f32.mrf.mxu0
      %v1437 = vpop.f32.mrf.mxu0
      %v1438 = vadd.f32 %v1259, %v1437
      %v1439 = vpop.f32.mrf.mxu0
      %1440 = vmatprep.mubr.bf16.mxu0 0
      %1441 = vmatmul.mubr.bf16.gmra.mxu0 %v1302
      %v1442 = vpop.f32.mrf.mxu0
      %v1443 = vadd.f32 %v1260, %v1442
      %v1444 = vpop.f32.mrf.mxu0
      %v1445 = vpop.f32.mrf.mxu0
      %v1446 = vadd.f32 %v1261, %v1445
      %v1447 = vpop.f32.mrf.mxu0
      %1448 = vmatprep.mubr.bf16.mxu0 0
      %1449 = vmatmul.mubr.bf16.gmra.mxu0 %v1303
      %v1450 = vpop.f32.mrf.mxu0
      %v1451 = vadd.f32 %v1262, %v1450
      %v1452 = vpop.f32.mrf.mxu0
      %v1453 = vpop.f32.mrf.mxu0
      %v1454 = vadd.f32 %v1263, %v1453
      %v1455 = vpop.f32.mrf.mxu0
      %1456 = vdwg.mxu0
      %v1457 = vpack.c.bf16 %v1398, %v1395
      %v1458 = vpack.c.bf16 %v1406, %v1403
      %v1459 = vpack.c.bf16 %v1414, %v1411
      %v1460 = vpack.c.bf16 %v1422, %v1419
      %v1461 = vpack.c.bf16 %v1430, %v1427
      %v1462 = vpack.c.bf16 %v1438, %v1435
      %v1463 = vpack.c.bf16 %v1446, %v1443
      %v1464 = vpack.c.bf16 %v1454, %v1451
      %v1465 = vand.u32 2147450879, %v1457
      %v1466 = vand.u32 2147450879, %v1458
      %v1467 = vand.u32 2147450879, %v1459
      %v1468 = vand.u32 2147450879, %v1460
      %v1469 = vand.u32 2147450879, %v1461
      %v1470 = vand.u32 2147450879, %v1462
      %v1471 = vand.u32 2147450879, %v1463
      %v1472 = vand.u32 2147450879, %v1464
      %v1473 = vsub.bf16 0, %v1465
      %v1474 = vsub.bf16 0, %v1466
      %v1475 = vsub.bf16 0, %v1467
      %v1476 = vsub.bf16 0, %v1468
      %v1477 = vsub.bf16 0, %v1469
      %v1478 = vsub.bf16 0, %v1470
      %v1479 = vsub.bf16 0, %v1471
      %v1480 = vsub.bf16 0, %v1472
      %v1482 = vmul.bf16 %v1473, 1069105081
      %v1483 = vpow.bf16.pop %v1482
      %v1485 = vmul.bf16 %v1474, 1069105081
      %v1486 = vpow.bf16.pop %v1485
      %v1488 = vmul.bf16 %v1475, 1069105081
      %v1489 = vpow.bf16.pop %v1488
      %v1491 = vmul.bf16 %v1476, 1069105081
      %v1492 = vpow.bf16.pop %v1491
      %v1494 = vmul.bf16 %v1477, 1069105081
      %v1495 = vpow.bf16.pop %v1494
      %v1497 = vmul.bf16 %v1478, 1069105081
      %v1498 = vpow.bf16.pop %v1497
      %v1500 = vmul.bf16 %v1479, 1069105081
      %v1501 = vpow.bf16.pop %v1500
      %v1503 = vmul.bf16 %v1480, 1069105081
      %v1504 = vpow.bf16.pop %v1503
      %vm1505 = vcmp.gt.bf16.partialorder %v1457, 0
      %vm1506 = vcmp.gt.bf16.partialorder %v1458, 0
      %vm1507 = vcmp.gt.bf16.partialorder %v1459, 0
      %vm1508 = vcmp.gt.bf16.partialorder %v1460, 0
      %vm1509 = vcmp.gt.bf16.partialorder %v1461, 0
      %vm1510 = vcmp.gt.bf16.partialorder %v1462, 0
      %vm1511 = vcmp.gt.bf16.partialorder %v1463, 0
      %vm1512 = vcmp.gt.bf16.partialorder %v1464, 0
      %v1513 = vmul.bf16 %v1483, 1073758208
      %v1514 = vmul.bf16 %v1486, 1073758208
      %v1515 = vmul.bf16 %v1489, 1073758208
      %v1516 = vmul.bf16 %v1492, 1073758208
      %v1517 = vmul.bf16 %v1495, 1073758208
      %v1518 = vmul.bf16 %v1498, 1073758208
      %v1519 = vmul.bf16 %v1501, 1073758208
      %v1520 = vmul.bf16 %v1504, 1073758208
      %v1521 = vadd.bf16 %v1513, 1065369472
      %v1522 = vadd.bf16 %v1514, 1065369472
      %v1523 = vadd.bf16 %v1515, 1065369472
      %v1524 = vadd.bf16 %v1516, 1065369472
      %v1525 = vadd.bf16 %v1517, 1065369472
      %v1526 = vadd.bf16 %v1518, 1065369472
      %v1527 = vadd.bf16 %v1519, 1065369472
      %v1528 = vadd.bf16 %v1520, 1065369472
      %v1529 = vmul.bf16 %v1483, %v1483
      %v1530 = vmul.bf16 %v1486, %v1486
      %v1531 = vmul.bf16 %v1489, %v1489
      %v1532 = vmul.bf16 %v1492, %v1492
      %v1533 = vmul.bf16 %v1495, %v1495
      %v1534 = vmul.bf16 %v1498, %v1498
      %v1535 = vmul.bf16 %v1501, %v1501
      %v1536 = vmul.bf16 %v1504, %v1504
      %v1537 = vadd.bf16 %v1529, %v1513
      %v1538 = vadd.bf16 %v1530, %v1514
      %v1539 = vadd.bf16 %v1531, %v1515
      %v1540 = vadd.bf16 %v1532, %v1516
      %v1541 = vadd.bf16 %v1533, %v1517
      %v1542 = vadd.bf16 %v1534, %v1518
      %v1543 = vadd.bf16 %v1535, %v1519
      %v1544 = vadd.bf16 %v1536, %v1520
      %v1545 = vsel %vm1505, %v1521, %v1537
      %v1546 = vsel %vm1506, %v1522, %v1538
      %v1547 = vsel %vm1507, %v1523, %v1539
      %v1548 = vsel %vm1508, %v1524, %v1540
      %v1549 = vsel %vm1509, %v1525, %v1541
      %v1550 = vsel %vm1510, %v1526, %v1542
      %v1551 = vsel %vm1511, %v1527, %v1543
      %v1552 = vsel %vm1512, %v1528, %v1544
      %v1553 = vmul.bf16 %v1513, %v1483
      %v1554 = vmul.bf16 %v1514, %v1486
      %v1555 = vmul.bf16 %v1515, %v1489
      %v1556 = vmul.bf16 %v1516, %v1492
      %v1557 = vmul.bf16 %v1517, %v1495
      %v1558 = vmul.bf16 %v1518, %v1498
      %v1559 = vmul.bf16 %v1519, %v1501
      %v1560 = vmul.bf16 %v1520, %v1504
      %v1561 = vadd.bf16 %v1545, %v1553
      %v1562 = vadd.bf16 %v1546, %v1554
      %v1563 = vadd.bf16 %v1547, %v1555
      %v1564 = vadd.bf16 %v1548, %v1556
      %v1565 = vadd.bf16 %v1549, %v1557
      %v1566 = vadd.bf16 %v1550, %v1558
      %v1567 = vadd.bf16 %v1551, %v1559
      %v1568 = vadd.bf16 %v1552, %v1560
      %v1569 = vadd.bf16 %v1545, 1073758208
      %v1570 = vadd.bf16 %v1546, 1073758208
      %v1571 = vadd.bf16 %v1547, 1073758208
      %v1572 = vadd.bf16 %v1548, 1073758208
      %v1573 = vadd.bf16 %v1549, 1073758208
      %v1574 = vadd.bf16 %v1550, 1073758208
      %v1575 = vadd.bf16 %v1551, 1073758208
      %v1576 = vadd.bf16 %v1552, 1073758208
      %v1577 = vsel %vm1505, %v1561, %v1569
      %v1578 = vsel %vm1506, %v1562, %v1570
      %v1579 = vsel %vm1507, %v1563, %v1571
      %v1580 = vsel %vm1508, %v1564, %v1572
      %v1581 = vsel %vm1509, %v1565, %v1573
      %v1582 = vsel %vm1510, %v1566, %v1574
      %v1583 = vsel %vm1511, %v1567, %v1575
      %v1584 = vsel %vm1512, %v1568, %v1576
      %v1585 = vmul.bf16 %v1457, %v1545
      %v1586 = vmul.bf16 %v1458, %v1546
      %v1587 = vmul.bf16 %v1459, %v1547
      %v1588 = vmul.bf16 %v1460, %v1548
      %v1589 = vmul.bf16 %v1461, %v1549
      %v1590 = vmul.bf16 %v1462, %v1550
      %v1591 = vmul.bf16 %v1463, %v1551
      %v1592 = vmul.bf16 %v1464, %v1552
      %v1593 = vrcp.bf16.pop %v1577
      %v1594 = vmul.bf16 %v1585, %v1593
      %v1595 = vrcp.bf16.pop %v1578
      %v1596 = vmul.bf16 %v1586, %v1595
      %v1597 = vrcp.bf16.pop %v1579
      %v1598 = vmul.bf16 %v1587, %v1597
      %v1599 = vrcp.bf16.pop %v1580
      %v1600 = vmul.bf16 %v1588, %v1599
      %v1601 = vrcp.bf16.pop %v1581
      %v1602 = vmul.bf16 %v1589, %v1601
      %v1603 = vrcp.bf16.pop %v1582
      %v1604 = vmul.bf16 %v1590, %v1603
      %v1605 = vrcp.bf16.pop %v1583
      %v1606 = vmul.bf16 %v1591, %v1605
      %v1607 = vrcp.bf16.pop %v1584
      %v1608 = vmul.bf16 %v1592, %v1607
      %v1617 = vunpack.c.l.b16 %v1594
      %v1618 = vunpack.c.h.b16 %v1594
      %v1619 = vunpack.c.l.b16 %v1596
      %v1620 = vunpack.c.h.b16 %v1596
      %v1621 = vunpack.c.l.b16 %v1598
      %v1622 = vunpack.c.h.b16 %v1598
      %v1623 = vunpack.c.l.b16 %v1600
      %v1624 = vunpack.c.h.b16 %v1600
      %v1625 = vunpack.c.l.b16 %v1602
      %v1626 = vunpack.c.h.b16 %v1602
      %v1627 = vunpack.c.l.b16 %v1604
      %v1628 = vunpack.c.h.b16 %v1604
      %v1629 = vunpack.c.l.b16 %v1606
      %v1630 = vunpack.c.h.b16 %v1606
      %v1631 = vunpack.c.l.b16 %v1608
      %v1632 = vunpack.c.h.b16 %v1608
      %v1633 = vpack.c.b16 %v1617, %v1617
      %v1634 = vpack.c.b16 %v1618, %v1618
      %v1635 = vpack.c.b16 %v1619, %v1619
      %v1636 = vpack.c.b16 %v1620, %v1620
      %v1637 = vpack.c.b16 %v1621, %v1621
      %v1638 = vpack.c.b16 %v1622, %v1622
      %v1639 = vpack.c.b16 %v1623, %v1623
      %v1640 = vpack.c.b16 %v1624, %v1624
      %v1641 = vpack.c.b16 %v1625, %v1625
      %v1642 = vpack.c.b16 %v1626, %v1626
      %v1643 = vpack.c.b16 %v1627, %v1627
      %v1644 = vpack.c.b16 %v1628, %v1628
      %v1645 = vpack.c.b16 %v1629, %v1629
      %v1646 = vpack.c.b16 %v1630, %v1630
      %v1647 = vpack.c.b16 %v1631, %v1631
      %v1648 = vpack.c.b16 %v1632, %v1632
      %s1665 = sshra.s32 %s1214, 3
      %s1666 = sand.u32 %s1214, 7
      %s1667 = smul.addr %s1665, 4
      %s1668 = scalar_lea.vmem [#allocation2], %s1667
      %1669 = vst [vmem:[%s1668] sm:$0xf] %v1633
      %1670 = vst [vmem:[%s1668 + $0x4] sm:$0xf] %v1634
      %1671 = vst [vmem:[%s1668 + $0x8] sm:$0xf] %v1635
      %1672 = vst [vmem:[%s1668 + $0xc] sm:$0xf] %v1636
      %1673 = vst [vmem:[%s1668 + $0x10] sm:$0xf] %v1637
      %1674 = vst [vmem:[%s1668 + $0x14] sm:$0xf] %v1638
      %1675 = vst [vmem:[%s1668 + $0x18] sm:$0xf] %v1639
      %1676 = vst [vmem:[%s1668 + $0x1c] sm:$0xf] %v1640
      %1677 = vst [vmem:[%s1668 + $0x20] sm:$0xf] %v1641
      %1678 = vst [vmem:[%s1668 + $0x24] sm:$0xf] %v1642
      %1679 = vst [vmem:[%s1668 + $0x28] sm:$0xf] %v1643
      %1680 = vst [vmem:[%s1668 + $0x2c] sm:$0xf] %v1644
      %1681 = vst [vmem:[%s1668 + $0x30] sm:$0xf] %v1645
      %1682 = vst [vmem:[%s1668 + $0x34] sm:$0xf] %v1646
      %1683 = vst [vmem:[%s1668 + $0x38] sm:$0xf] %v1647
      %1684 = vst [vmem:[%s1668 + $0x3c] sm:$0xf] %v1648
      %p1685 = scmp.eq.s32.totalorder %s23, 2
      // Predicated region
      $region61: #{gnn_forward.1} parent=51 // pred_check
        %p1686 = pneg %p1685
      $region62: #{gnn_forward.1} parent=51 // pred_check_branch
        %1688 = sbr.rel (%p1686) target = $region64
      $region63: #{gnn_forward.1} parent=51 // pred_region
        %v1689 = vld [vmem:[%s6] sm:$0xf]
        %v1690 = vld [vmem:[%s6 + $0x4] sm:$0xf]
        %v1691 = vld [vmem:[%s6 + $0x8] sm:$0xf]
        %v1692 = vld [vmem:[%s6 + $0xc] sm:$0xf]
        %v1693 = vld [vmem:[%s6 + $0x10] sm:$0xf]
        %v1694 = vld [vmem:[%s6 + $0x14] sm:$0xf]
        %v1695 = vld [vmem:[%s6 + $0x18] sm:$0xf]
        %v1696 = vld [vmem:[%s6 + $0x1c] sm:$0xf]
        %v1697 = vld [vmem:[%s6 + $0x20] sm:$0xf]
        %v1698 = vld [vmem:[%s6 + $0x24] sm:$0xf]
        %v1699 = vld [vmem:[%s6 + $0x28] sm:$0xf]
        %v1700 = vld [vmem:[%s6 + $0x2c] sm:$0xf]
        %v1701 = vld [vmem:[%s6 + $0x30] sm:$0xf]
        %v1702 = vld [vmem:[%s6 + $0x34] sm:$0xf]
        %v1703 = vld [vmem:[%s6 + $0x38] sm:$0xf]
        %v1704 = vld [vmem:[%s6 + $0x3c] sm:$0xf]
        %v1705 = vld [vmem:[%s7] sm:$0x1]
        %v1707 = vlaneseq
        %v1708 = vshrl.u32 %v1707, 7
        %v1709 = vsub.s32 0, %v1708
        %v1710 = vrot.slane %v1705, %v1709
        %v1728 = vunpack.c.l.b16 %v1689
        %v1729 = vunpack.c.l.b16 %v1690
        %v1730 = vunpack.c.l.b16 %v1691
        %v1731 = vunpack.c.l.b16 %v1692
        %v1732 = vunpack.c.l.b16 %v1693
        %v1733 = vunpack.c.l.b16 %v1694
        %v1734 = vunpack.c.l.b16 %v1695
        %v1735 = vunpack.c.l.b16 %v1696
        %v1736 = vunpack.c.l.b16 %v1697
        %v1737 = vunpack.c.l.b16 %v1698
        %v1738 = vunpack.c.l.b16 %v1699
        %v1739 = vunpack.c.l.b16 %v1700
        %v1740 = vunpack.c.l.b16 %v1701
        %v1741 = vunpack.c.l.b16 %v1702
        %v1742 = vunpack.c.l.b16 %v1703
        %v1743 = vunpack.c.l.b16 %v1704
        %v1744 = vpack.c.b16 %v1729, %v1728
        %v1745 = vpack.c.b16 %v1731, %v1730
        %v1746 = vpack.c.b16 %v1733, %v1732
        %v1747 = vpack.c.b16 %v1735, %v1734
        %v1748 = vpack.c.b16 %v1737, %v1736
        %v1749 = vpack.c.b16 %v1739, %v1738
        %v1750 = vpack.c.b16 %v1741, %v1740
        %v1751 = vpack.c.b16 %v1743, %v1742
        %1760 = vmatprep.subr.bf16.mxu0 0
        %1761 = vmatpush1.bf16.msra.mxu0 %v1751
        %1762 = vmatprep.subr.bf16.mxu0 0
        %1763 = vmatpush1.bf16.msra.mxu0 %v1750
        %1764 = vmatprep.subr.bf16.mxu0 0
        %1765 = vmatpush1.bf16.msra.mxu0 %v1749
        %1766 = vmatprep.subr.bf16.mxu0 0
        %1767 = vmatpush1.bf16.msra.mxu0 %v1748
        %1768 = vmatprep.subr.bf16.mxu0 0
        %1769 = vmatpush1.bf16.msra.mxu0 %v1747
        %1770 = vmatprep.subr.bf16.mxu0 0
        %1771 = vmatpush1.bf16.msra.mxu0 %v1746
        %1772 = vmatprep.subr.bf16.mxu0 0
        %1773 = vmatpush1.bf16.msra.mxu0 %v1745
        %1774 = vmatprep.subr.bf16.mxu0 0
        %1775 = vmatpush1.bf16.msra.mxu0 %v1744
        %1776 = vmatprep.subr.bf16.mxu0 0
        %1777 = vmatpush2.bf16.msra.mxu0 0
        %1778 = vmatprep.subr.bf16.mxu0 0
        %1779 = vmatpush2.bf16.msra.mxu0 0
        %1780 = vmatprep.subr.bf16.mxu0 0
        %1781 = vmatpush2.bf16.msra.mxu0 0
        %1782 = vmatprep.subr.bf16.mxu0 0
        %1783 = vmatpush2.bf16.msra.mxu0 0
        %1784 = vmatprep.subr.bf16.mxu0 0
        %1785 = vmatpush2.bf16.msra.mxu0 0
        %1786 = vmatprep.subr.bf16.mxu0 0
        %1787 = vmatpush2.bf16.msra.mxu0 0
        %1788 = vmatprep.subr.bf16.mxu0 0
        %1789 = vmatpush2.bf16.msra.mxu0 0
        %1790 = vmatprep.subr.bf16.mxu0 0
        %1791 = vmatpush2.bf16.msra.mxu0 0
        %1792 = vmatprep.mubr.bf16.mxu0 0
        %1793 = vmatmul.mubr.bf16.gmra.mxu0 %v1594
        %v1794 = vpop.f32.mrf.mxu0
        %v1795 = vadd.f32 %v1710, %v1794
        %v1796 = vpop.f32.mrf.mxu0
        %v1797 = vpop.f32.mrf.mxu0
        %v1798 = vadd.f32 %v1710, %v1797
        %v1799 = vpop.f32.mrf.mxu0
        %1800 = vmatprep.mubr.bf16.mxu0 0
        %1801 = vmatmul.mubr.bf16.gmra.mxu0 %v1596
        %v1802 = vpop.f32.mrf.mxu0
        %v1803 = vadd.f32 %v1710, %v1802
        %v1804 = vpop.f32.mrf.mxu0
        %v1805 = vpop.f32.mrf.mxu0
        %v1806 = vadd.f32 %v1710, %v1805
        %v1807 = vpop.f32.mrf.mxu0
        %1808 = vmatprep.mubr.bf16.mxu0 0
        %1809 = vmatmul.mubr.bf16.gmra.mxu0 %v1598
        %v1810 = vpop.f32.mrf.mxu0
        %v1811 = vadd.f32 %v1710, %v1810
        %v1812 = vpop.f32.mrf.mxu0
        %v1813 = vpop.f32.mrf.mxu0
        %v1814 = vadd.f32 %v1710, %v1813
        %v1815 = vpop.f32.mrf.mxu0
        %1816 = vmatprep.mubr.bf16.mxu0 0
        %1817 = vmatmul.mubr.bf16.gmra.mxu0 %v1600
        %v1818 = vpop.f32.mrf.mxu0
        %v1819 = vadd.f32 %v1710, %v1818
        %v1820 = vpop.f32.mrf.mxu0
        %v1821 = vpop.f32.mrf.mxu0
        %v1822 = vadd.f32 %v1710, %v1821
        %v1823 = vpop.f32.mrf.mxu0
        %1824 = vmatprep.mubr.bf16.mxu0 0
        %1825 = vmatmul.mubr.bf16.gmra.mxu0 %v1602
        %v1826 = vpop.f32.mrf.mxu0
        %v1827 = vadd.f32 %v1710, %v1826
        %v1828 = vpop.f32.mrf.mxu0
        %v1829 = vpop.f32.mrf.mxu0
        %v1830 = vadd.f32 %v1710, %v1829
        %v1831 = vpop.f32.mrf.mxu0
        %1832 = vmatprep.mubr.bf16.mxu0 0
        %1833 = vmatmul.mubr.bf16.gmra.mxu0 %v1604
        %v1834 = vpop.f32.mrf.mxu0
        %v1835 = vadd.f32 %v1710, %v1834
        %v1836 = vpop.f32.mrf.mxu0
        %v1837 = vpop.f32.mrf.mxu0
        %v1838 = vadd.f32 %v1710, %v1837
        %v1839 = vpop.f32.mrf.mxu0
        %1840 = vmatprep.mubr.bf16.mxu0 0
        %1841 = vmatmul.mubr.bf16.gmra.mxu0 %v1606
        %v1842 = vpop.f32.mrf.mxu0
        %v1843 = vadd.f32 %v1710, %v1842
        %v1844 = vpop.f32.mrf.mxu0
        %v1845 = vpop.f32.mrf.mxu0
        %v1846 = vadd.f32 %v1710, %v1845
        %v1847 = vpop.f32.mrf.mxu0
        %1848 = vmatprep.mubr.bf16.mxu0 0
        %1849 = vmatmul.mubr.bf16.gmra.mxu0 %v1608
        %v1850 = vpop.f32.mrf.mxu0
        %v1851 = vadd.f32 %v1710, %v1850
        %v1852 = vpop.f32.mrf.mxu0
        %v1853 = vpop.f32.mrf.mxu0
        %v1854 = vadd.f32 %v1710, %v1853
        %v1855 = vpop.f32.mrf.mxu0
        %1856 = vdwg.mxu0
        %1857 = vst [vmem:[%s353] sm:$0xff] %v1795
        %1858 = vst [vmem:[%s353 + $0x8] sm:$0xff] %v1798
        %1859 = vst [vmem:[%s353 + $0x10] sm:$0xff] %v1803
        %1860 = vst [vmem:[%s353 + $0x18] sm:$0xff] %v1806
        %1861 = vst [vmem:[%s353 + $0x20] sm:$0xff] %v1811
        %1862 = vst [vmem:[%s353 + $0x28] sm:$0xff] %v1814
        %1863 = vst [vmem:[%s353 + $0x30] sm:$0xff] %v1819
        %1864 = vst [vmem:[%s353 + $0x38] sm:$0xff] %v1822
        %1865 = vst [vmem:[%s353 + $0x40] sm:$0xff] %v1827
        %1866 = vst [vmem:[%s353 + $0x48] sm:$0xff] %v1830
        %1867 = vst [vmem:[%s353 + $0x50] sm:$0xff] %v1835
        %1868 = vst [vmem:[%s353 + $0x58] sm:$0xff] %v1838
        %1869 = vst [vmem:[%s353 + $0x60] sm:$0xff] %v1843
        %1870 = vst [vmem:[%s353 + $0x68] sm:$0xff] %v1846
        %1871 = vst [vmem:[%s353 + $0x70] sm:$0xff] %v1851
        %1872 = vst [vmem:[%s353 + $0x78] sm:$0xff] %v1854
      $region64: #{gnn_forward.1} parent=51 // pred_fallthru
        _
      %s1873 = smul.u32 16, %s24
      %p1874 = scmp.lt.s32.totalorder %s1873, 15
      %s1875 = scalar_select %p1874, %s1873, 15
      %s1876 = smul.addr %s1875, 8
      %s1877 = scalar_lea.vmem %s8, %s1876
      // Predicated region
      $region65: #{gnn_forward.1} parent=51 // pred_check
        %p1878 = pneg %p232
      $region66: #{gnn_forward.1} parent=51 // pred_check_branch
        %1880 = sbr.rel (%p1878) target = $region68
      $region67: #{gnn_forward.1} parent=51 // pred_region
        %s1881 = smul.u32 16, %s24
      $region68: #{gnn_forward.1} parent=51 // pred_fallthru
        _
      // Predicated region
      $region69: #{gnn_forward.1} parent=51 // pred_check
        %p1882 = pneg %p232
      $region70: #{gnn_forward.1} parent=51 // pred_check_branch
        %1884 = sbr.rel (%p1882) target = $region72
      $region71: #{gnn_forward.1} parent=51 // pred_region
        %s1885 = smul.u32 16, %s24
        %p1886 = scmp.lt.s32.totalorder %s1885, 15
        %s1887 = scalar_select %p1886, %s1885, 15
        %s1888 = smul.addr %s1887, 8
        %s1889 = scalar_lea.vmem %s8, %s1888
      $region72: #{gnn_forward.1} parent=51 // pred_fallthru
        _
    $region52: #{gnn_forward.1} parent=5 // pred_fallthru
      _
    %p1890 = scmp.le.s32.totalorder 2, %s14
    // Predicated region
    $region73: #{gnn_forward.1} parent=5 // pred_check
      %p1891 = pneg %p1890
    $region74: #{gnn_forward.1} parent=5 // pred_check_branch
      %1893 = sbr.rel (%p1891) target = $region76
    $region75: #{gnn_forward.1} parent=5 // pred_region
      %s1894 = ssub.s32 %s14, 2
    $region76: #{gnn_forward.1} parent=5 // pred_fallthru
      _
  $region6: #{gnn_forward.1} parent=0 // loop_footer
    %s18 = sadd.s32 1, %s14
  $region7: #{gnn_forward.1} parent=0 // loop_footer_branch
    %13 = sbr.rel target = $region3
  $region8: #{gnn_forward.1} parent=0 // loop_exit
    _

</llo_original>
